<compile_context>
chip_gen: v6e
topology: v6e:2x2x1
jax: 0.10.0
libtpu: 0.0.40
codegen_flags: <defaults>
</compile_context>

<pallas_src>
import functools

import jax
import jax.numpy as jnp
from jax import lax
from jax.experimental import pallas as pl
from jax.experimental.pallas import tpu as pltpu

EPS = 1e-7
_LANES = 128


def _l2_normalize_rows(x, eps):
    """Row L2 normalization with the PyTorch PKT semantics (eps + NaN scrub)."""
    norm = jnp.sqrt(jnp.sum(x * x, axis=1, keepdims=True))
    y = x / (norm + eps)
    return jnp.where(y == y, y, 0.0)  # output_net[output_net != output_net] = 0


def _pkt_kernel(sq_ref, tq_ref, sk_ref, tk_ref,     # pre-normalized inputs
                o_ref,                              # (1, 128) lane-dense partial per row-block
                rs_m_ref, rs_t_ref, kl_ref,         # (block, 1) f32 scratch accumulators
                *, n_valid, blk, nb, approx_recip, eps, need_mask):
    i = pl.program_id(0)      # query row-block  ("parallel")
    p = pl.program_id(1)      # pass: 0 = row sums, 1 = KL   ("arbitrary")
    j = pl.program_id(2)      # key row-block    ("arbitrary", innermost)

    # Gram blocks on the MXU.  Contract dim 1 of BOTH operands -> no transposed
    # copy of the streamed key block is ever materialized.
    dn = (((1,), (1,)), ((), ()))
    ms = lax.dot_general(sq_ref[...], sk_ref[...], dn,
                         preferred_element_type=jnp.float32)
    ts = lax.dot_general(tq_ref[...], tk_ref[...], dn,
                         preferred_element_type=jnp.float32)
    ms = (ms + 1.0) * 0.5
    ts = (ts + 1.0) * 0.5

    if need_mask:
        # Padded key rows are zero -> Gram value 0 -> shifted to 0.5; zero them
        # so they contribute nothing to row sums or the KL term.  Statically
        # skipped whenever N is a multiple of the block size.
        col_ok = (j * blk + lax.broadcasted_iota(jnp.int32, (blk, blk), 1)) < n_valid
        ms = jnp.where(col_ok, ms, 0.0)
        ts = jnp.where(col_ok, ts, 0.0)

    # ---------------- pass 0: per-row similarity sums ----------------
    @pl.when(p == 0)
    def _pass_rowsums():
        @pl.when(j == 0)
        def _init():
            rs_m_ref[...] = jnp.zeros_like(rs_m_ref)
            rs_t_ref[...] = jnp.zeros_like(rs_t_ref)

        rs_m_ref[...] += jnp.sum(ms, axis=1, keepdims=True)
        rs_t_ref[...] += jnp.sum(ts, axis=1, keepdims=True)

    # ---------------- pass 1: fold KL into a (block, 1) accumulator ----------------
    @pl.when(p == 1)
    def _pass_kl():
        @pl.when(j == 0)
        def _invert():
            # ONE reciprocal per query row, reused for every key block.
            if approx_recip:
                rs_m_ref[...] = pl.reciprocal(rs_m_ref[...], approx=True)
                rs_t_ref[...] = pl.reciprocal(rs_t_ref[...], approx=True)
            else:
                rs_m_ref[...] = 1.0 / rs_m_ref[...]
                rs_t_ref[...] = 1.0 / rs_t_ref[...]
            kl_ref[...] = jnp.zeros_like(kl_ref)

        m = ms * rs_m_ref[...]            # VPU multiplies, not EUP divides
        t = ts * rs_t_ref[...]
        if approx_recip:
            ratio = (t + eps) * pl.reciprocal(m + eps, approx=True)
        else:
            ratio = (t + eps) / (m + eps)
        # Padded key columns have t == 0 -> they contribute exactly 0 here.
        kl_ref[...] += jnp.sum(t * jnp.log(ratio), axis=1, keepdims=True)

        @pl.when(j == nb - 1)
        def _emit():
            kl_row = kl_ref[...]
            if need_mask:
                row_ok = (i * blk +
                          lax.broadcasted_iota(jnp.int32, (blk, 1), 0)) < n_valid
                kl_row = jnp.where(row_ok, kl_row, 0.0)
            partial = jnp.sum(kl_row)
            # Lane-dense (unmasked) store; host sums & divides by N.
            o_ref[...] = jnp.full((1, _LANES), partial, dtype=jnp.float32)


def pkt_loss(output_net: jax.Array, target_net: jax.Array, *,
             block: int = 128, fast: bool = False, eps: float = EPS) -> jax.Array:
    """Pallas TPU implementation of PKTLoss.forward for (N, D) feature matrices.

    fast=False : f32 MXU inputs + exact reciprocals (matches PyTorch closely).
    fast=True  : bf16 HBM/MXU inputs + approx reciprocals (perf path; accuracy
                 degrades slowly with N — fine for a distillation loss).
    Use block=256 on v6e/v7x for the fast path at large N; keep 128 on v5e.
    """
    assert output_net.shape == target_net.shape and output_net.ndim == 2
    assert block % 128 == 0, "block must be a multiple of 128 (use 256 on v6e/v7x)"
    N, D = output_net.shape

    # Pre-normalize ONCE here (instead of per grid step inside the kernel).
    s = _l2_normalize_rows(output_net.astype(jnp.float32), eps)
    t = _l2_normalize_rows(target_net.astype(jnp.float32), eps)
    in_dtype = jnp.bfloat16 if fast else jnp.float32
    s = s.astype(in_dtype)
    t = t.astype(in_dtype)

    n_pad = -(-N // block) * block
    d_pad = -(-D // _LANES) * _LANES
    if (n_pad, d_pad) != (N, D):
        pad = ((0, n_pad - N), (0, d_pad - D))
        s = jnp.pad(s, pad)
        t = jnp.pad(t, pad)

    nb = n_pad // block
    need_mask = (N % block) != 0
    itemsize = jnp.dtype(in_dtype).itemsize

    # VMEM budget: two-pass scheme -> O(block * d_pad), independent of N.
    in_vmem = 4 * 2 * block * d_pad * itemsize      # 4 inputs, double-buffered
    scratch_vmem = 3 * block * _LANES * 4           # (block, 1) f32, lane-padded
    out_vmem = 2 * 8 * _LANES * 4
    need = in_vmem + scratch_vmem + out_vmem
    # TODO(synk): tile the feature dimension (extra grid axis + f32 Gram
    # accumulator scratch) if `need` ever exceeds the chip budget for huge D.
    assert need <= 56 * 2**20, (
        f"PKT kernel VMEM footprint {need} B too large; reduce `block` or tile D")
    vmem_limit = int(min(96 * 2**20, max(16 * 2**20, 2 * need)))

    kernel = functools.partial(
        _pkt_kernel, n_valid=N, blk=block, nb=nb,
        approx_recip=fast, eps=eps, need_mask=need_mask)

    cost = pl.CostEstimate(
        flops=8 * n_pad * n_pad * d_pad + 16 * n_pad * n_pad,
        transcendentals=2 * n_pad * n_pad + 4 * n_pad,
        bytes_accessed=(2 + 4 * nb) * n_pad * d_pad * itemsize + nb * _LANES * 4,
    )

    out = pl.pallas_call(
        kernel,
        out_shape=jax.ShapeDtypeStruct((1, nb * _LANES), jnp.float32),
        grid=(nb, 2, nb),
        in_specs=[
            pl.BlockSpec((block, d_pad), lambda i, p, j: (i, 0)),  # query rows of s (resident per i)
            pl.BlockSpec((block, d_pad), lambda i, p, j: (i, 0)),  # query rows of t
            pl.BlockSpec((block, d_pad), lambda i, p, j: (j, 0)),  # key rows of s (streamed)
            pl.BlockSpec((block, d_pad), lambda i, p, j: (j, 0)),  # key rows of t
        ],
        out_specs=pl.BlockSpec((1, _LANES), lambda i, p, j: (0, i)),
        scratch_shapes=[
            pltpu.VMEM((block, 1), jnp.float32),   # model row-sums -> reciprocals
            pltpu.VMEM((block, 1), jnp.float32),   # target row-sums -> reciprocals
            pltpu.VMEM((block, 1), jnp.float32),   # KL row accumulator
        ],
        compiler_params=pltpu.CompilerParams(
            dimension_semantics=("parallel", "arbitrary", "arbitrary"),
            vmem_limit_bytes=vmem_limit,
        ),
        cost_estimate=cost,
    )(s, t, s, t)

    partials = out.reshape(nb, _LANES)[:, 0]
    return jnp.sum(partials) / N


def _pkt_loss_ref(output_net, target_net, eps=EPS):
    """Pure-JAX reference mirroring the PyTorch code (f32, HIGHEST-precision dots)."""
    hi = lax.Precision.HIGHEST
    on = output_net / (jnp.sqrt(jnp.sum(output_net**2, axis=1, keepdims=True)) + eps)
    on = jnp.where(jnp.isnan(on), 0.0, on)
    tn = target_net / (jnp.sqrt(jnp.sum(target_net**2, axis=1, keepdims=True)) + eps)
    tn = jnp.where(jnp.isnan(tn), 0.0, tn)
    ms = (jnp.dot(on, on.T, precision=hi) + 1.0) / 2.0
    ts = (jnp.dot(tn, tn.T, precision=hi) + 1.0) / 2.0
    ms = ms / jnp.sum(ms, axis=1, keepdims=True)
    ts = ts / jnp.sum(ts, axis=1, keepdims=True)
    return jnp.mean(jnp.sum(ts * jnp.log((ts + eps) / (ms + eps)), axis=1))


if __name__ == "__main__":
    key = jax.random.PRNGKey(0)
    k1, k2, k3, k4, k5, k6 = jax.random.split(key, 6)

    # Case 1: tiny shape implied by the module (batch of 8 feature vectors, dim 32).
    N, D = 8, 32
    out_net = jax.random.normal(k1, (N, D), dtype=jnp.float32)   # student features
    tgt_net = jax.random.normal(k2, (N, D), dtype=jnp.float32)   # teacher features
    loss = pkt_loss(out_net, tgt_net)
    jax.block_until_ready(loss)
    ref = _pkt_loss_ref(out_net, tgt_net)
    assert jnp.allclose(loss, ref, atol=1e-4, rtol=2e-3), (loss, ref)

    # Case 2: block-aligned N -> exercises the 2x2x2-pass grid with masks skipped.
    N2, D2 = 256, 96
    out2 = jax.random.normal(k3, (N2, D2), dtype=jnp.float32)
    tgt2 = jax.random.normal(k4, (N2, D2), dtype=jnp.float32)
    loss2 = pkt_loss(out2, tgt2, block=128)
    jax.block_until_ready(loss2)
    ref2 = _pkt_loss_ref(out2, tgt2)
    assert jnp.allclose(loss2, ref2, atol=1e-4, rtol=2e-3), (loss2, ref2)

    # Case 3: non-aligned N -> exercises the row/column padding masks.
    N3, D3 = 200, 96
    out3 = jax.random.normal(k5, (N3, D3), dtype=jnp.float32)
    tgt3 = jax.random.normal(k6, (N3, D3), dtype=jnp.float32)
    loss3 = pkt_loss(out3, tgt3, block=128)
    jax.block_until_ready(loss3)
    ref3 = _pkt_loss_ref(out3, tgt3)
    assert jnp.allclose(loss3, ref3, atol=1e-4, rtol=2e-3), (loss3, ref3)

    # Case 4: fast path (bf16 HBM/MXU inputs + approx reciprocals); loose tolerance.
    loss4 = pkt_loss(out2, tgt2, block=128, fast=True)
    jax.block_until_ready(loss4)
    assert jnp.allclose(loss4, ref2, atol=5e-3, rtol=0.15), (loss4, ref2)

    print("KERNEL_OK")
</pallas_src>

<mosaic_0001>
module attributes {stable_mosaic.version = 11 : i64} {
  func.func @_pkt_kernel(%arg0: i32, %arg1: i32, %arg2: i32, %arg3: memref<128x128xf32, #tpu.memory_space<vmem>>, %arg4: memref<128x128xf32, #tpu.memory_space<vmem>>, %arg5: memref<128x128xf32, #tpu.memory_space<vmem>>, %arg6: memref<128x128xf32, #tpu.memory_space<vmem>>, %arg7: memref<1x128xf32, #tpu.memory_space<vmem>>, %arg8: memref<128x1xf32, #tpu.memory_space<vmem>>, %arg9: memref<128x1xf32, #tpu.memory_space<vmem>>, %arg10: memref<128x1xf32, #tpu.memory_space<vmem>>) attributes {dimension_semantics = [#tpu.dimension_semantics<parallel>, #tpu.dimension_semantics<arbitrary>, #tpu.dimension_semantics<arbitrary>], iteration_bounds = array<i64: 1, 2, 1>, scalar_prefetch = 0 : i64, scratch_operands = 3 : i64, tpu.core_type = #tpu.core_type<tc>, window_params = [{transform_indices = @transform_0, window_bounds = array<i64: 128, 128>}, {transform_indices = @transform_1, window_bounds = array<i64: 128, 128>}, {transform_indices = @transform_2, window_bounds = array<i64: 128, 128>}, {transform_indices = @transform_3, window_bounds = array<i64: 128, 128>}, {transform_indices = @transform_4, window_bounds = array<i64: 1, 128>}]} {
    %c0 = arith.constant 0 : index
    %c0_0 = arith.constant 0 : index
    %0 = vector.load %arg3[%c0, %c0_0] : memref<128x128xf32, #tpu.memory_space<vmem>>, vector<128x128xf32>
    %c0_1 = arith.constant 0 : index
    %c0_2 = arith.constant 0 : index
    %1 = vector.load %arg5[%c0_1, %c0_2] : memref<128x128xf32, #tpu.memory_space<vmem>>, vector<128x128xf32>
    %cst = arith.constant dense<0.000000e+00> : vector<128x128xf32>
    %2 = tpu.matmul %0, %1, %cst {dimension_numbers = #tpu.dot_dimension_numbers<[1], [1], [0], [0], [0, 0, 1, 0], [], []>} : vector<128x128xf32>, vector<128x128xf32>, vector<128x128xf32> -> vector<128x128xf32>
    %c0_3 = arith.constant 0 : index
    %c0_4 = arith.constant 0 : index
    %3 = vector.load %arg4[%c0_3, %c0_4] : memref<128x128xf32, #tpu.memory_space<vmem>>, vector<128x128xf32>
    %c0_5 = arith.constant 0 : index
    %c0_6 = arith.constant 0 : index
    %4 = vector.load %arg6[%c0_5, %c0_6] : memref<128x128xf32, #tpu.memory_space<vmem>>, vector<128x128xf32>
    %cst_7 = arith.constant dense<0.000000e+00> : vector<128x128xf32>
    %5 = tpu.matmul %3, %4, %cst_7 {dimension_numbers = #tpu.dot_dimension_numbers<[1], [1], [0], [0], [0, 0, 1, 0], [], []>} : vector<128x128xf32>, vector<128x128xf32>, vector<128x128xf32> -> vector<128x128xf32>
    %cst_8 = arith.constant 1.000000e+00 : f32
    %6 = vector.broadcast %cst_8 : f32 to vector<128x128xf32>
    %7 = arith.addf %2, %6 : vector<128x128xf32>
    %cst_9 = arith.constant 5.000000e-01 : f32
    %8 = vector.broadcast %cst_9 : f32 to vector<128x128xf32>
    %9 = arith.mulf %7, %8 : vector<128x128xf32>
    %cst_10 = arith.constant 1.000000e+00 : f32
    %10 = vector.broadcast %cst_10 : f32 to vector<128x128xf32>
    %11 = arith.addf %5, %10 : vector<128x128xf32>
    %cst_11 = arith.constant 5.000000e-01 : f32
    %12 = vector.broadcast %cst_11 : f32 to vector<128x128xf32>
    %13 = arith.mulf %11, %12 : vector<128x128xf32>
    %c128_i32 = arith.constant 128 : i32
    %14 = arith.muli %arg2, %c128_i32 : i32
    %15 = tpu.iota {dimensions = array<i32: 1>} : vector<128x128xi32>
    %16 = vector.broadcast %14 : i32 to vector<128x128xi32>
    %17 = arith.addi %16, %15 : vector<128x128xi32>
    %c8_i32 = arith.constant 8 : i32
    %18 = vector.broadcast %c8_i32 : i32 to vector<128x128xi32>
    %19 = arith.cmpi slt, %17, %18 : vector<128x128xi32>
    %cst_12 = arith.constant 0.000000e+00 : f32
    %20 = vector.broadcast %cst_12 : f32 to vector<128x128xf32>
    %21 = arith.select %19, %9, %20 : vector<128x128xi1>, vector<128x128xf32>
    %cst_13 = arith.constant 0.000000e+00 : f32
    %22 = vector.broadcast %cst_13 : f32 to vector<128x128xf32>
    %23 = arith.select %19, %13, %22 : vector<128x128xi1>, vector<128x128xf32>
    %c0_i32 = arith.constant 0 : i32
    %24 = arith.cmpi eq, %arg1, %c0_i32 : i32
    %25 = arith.extui %24 : i1 to i32
    %c0_i32_14 = arith.constant 0 : i32
    %26 = arith.cmpi ne, %25, %c0_i32_14 : i32
    scf.if %26 {
      %c0_i32_16 = arith.constant 0 : i32
      %30 = arith.cmpi eq, %arg2, %c0_i32_16 : i32
      %31 = arith.extui %30 : i1 to i32
      %c0_i32_17 = arith.constant 0 : i32
      %32 = arith.cmpi ne, %31, %c0_i32_17 : i32
      scf.if %32 {
        %cst_28 = arith.constant 0.000000e+00 : f32
        %43 = vector.broadcast %cst_28 : f32 to vector<128x1xf32>
        %c0_29 = arith.constant 0 : index
        %c0_30 = arith.constant 0 : index
        %44 = vector.load %arg8[%c0_29, %c0_30] : memref<128x1xf32, #tpu.memory_space<vmem>>, vector<128x1xf32>
        tpu.vector_store %arg8[%c0_29, %c0_30], %43 {strides = array<i32>} : memref<128x1xf32, #tpu.memory_space<vmem>>, vector<128x1xf32>,
        %cst_31 = arith.constant 0.000000e+00 : f32
        %45 = vector.broadcast %cst_31 : f32 to vector<128x1xf32>
        %c0_32 = arith.constant 0 : index
        %c0_33 = arith.constant 0 : index
        %46 = vector.load %arg9[%c0_32, %c0_33] : memref<128x1xf32, #tpu.memory_space<vmem>>, vector<128x1xf32>
        tpu.vector_store %arg9[%c0_32, %c0_33], %45 {strides = array<i32>} : memref<128x1xf32, #tpu.memory_space<vmem>>, vector<128x1xf32>,
      } else {
      }
      %c0_18 = arith.constant 0 : index
      %c0_19 = arith.constant 0 : index
      %33 = vector.load %arg8[%c0_18, %c0_19] : memref<128x1xf32, #tpu.memory_space<vmem>>, vector<128x1xf32>
      %cst_20 = arith.constant dense<0.000000e+00> : vector<128xf32>
      %34 = vector.multi_reduction <add>, %21, %cst_20 [1] : vector<128x128xf32> to vector<128xf32>
      %35 = vector.shape_cast %34 : vector<128xf32> to vector<128x1xf32>
      %36 = arith.addf %33, %35 : vector<128x1xf32>
      %c0_21 = arith.constant 0 : index
      %c0_22 = arith.constant 0 : index
      %37 = vector.load %arg8[%c0_21, %c0_22] : memref<128x1xf32, #tpu.memory_space<vmem>>, vector<128x1xf32>
      tpu.vector_store %arg8[%c0_21, %c0_22], %36 {strides = array<i32>} : memref<128x1xf32, #tpu.memory_space<vmem>>, vector<128x1xf32>,
      %c0_23 = arith.constant 0 : index
      %c0_24 = arith.constant 0 : index
      %38 = vector.load %arg9[%c0_23, %c0_24] : memref<128x1xf32, #tpu.memory_space<vmem>>, vector<128x1xf32>
      %cst_25 = arith.constant dense<0.000000e+00> : vector<128xf32>
      %39 = vector.multi_reduction <add>, %23, %cst_25 [1] : vector<128x128xf32> to vector<128xf32>
      %40 = vector.shape_cast %39 : vector<128xf32> to vector<128x1xf32>
      %41 = arith.addf %38, %40 : vector<128x1xf32>
      %c0_26 = arith.constant 0 : index
      %c0_27 = arith.constant 0 : index
      %42 = vector.load %arg9[%c0_26, %c0_27] : memref<128x1xf32, #tpu.memory_space<vmem>>, vector<128x1xf32>
      tpu.vector_store %arg9[%c0_26, %c0_27], %41 {strides = array<i32>} : memref<128x1xf32, #tpu.memory_space<vmem>>, vector<128x1xf32>,
    } else {
    }
    %c1_i32 = arith.constant 1 : i32
    %27 = arith.cmpi eq, %arg1, %c1_i32 : i32
    %28 = arith.extui %27 : i1 to i32
    %c0_i32_15 = arith.constant 0 : i32
    %29 = arith.cmpi ne, %28, %c0_i32_15 : i32
    scf.if %29 {
      %c0_i32_16 = arith.constant 0 : i32
      %30 = arith.cmpi eq, %arg2, %c0_i32_16 : i32
      %31 = arith.extui %30 : i1 to i32
      %c0_i32_17 = arith.constant 0 : i32
      %32 = arith.cmpi ne, %31, %c0_i32_17 : i32
      scf.if %32 {
        %c0_31 = arith.constant 0 : index
        %c0_32 = arith.constant 0 : index
        %54 = vector.load %arg8[%c0_31, %c0_32] : memref<128x1xf32, #tpu.memory_space<vmem>>, vector<128x1xf32>
        %cst_33 = arith.constant 1.000000e+00 : f32
        %55 = vector.broadcast %cst_33 : f32 to vector<128x1xf32>
        %56 = arith.divf %55, %54 : vector<128x1xf32>
        %c0_34 = arith.constant 0 : index
        %c0_35 = arith.constant 0 : index
        %57 = vector.load %arg8[%c0_34, %c0_35] : memref<128x1xf32, #tpu.memory_space<vmem>>, vector<128x1xf32>
        tpu.vector_store %arg8[%c0_34, %c0_35], %56 {strides = array<i32>} : memref<128x1xf32, #tpu.memory_space<vmem>>, vector<128x1xf32>,
        %c0_36 = arith.constant 0 : index
        %c0_37 = arith.constant 0 : index
        %58 = vector.load %arg9[%c0_36, %c0_37] : memref<128x1xf32, #tpu.memory_space<vmem>>, vector<128x1xf32>
        %cst_38 = arith.constant 1.000000e+00 : f32
        %59 = vector.broadcast %cst_38 : f32 to vector<128x1xf32>
        %60 = arith.divf %59, %58 : vector<128x1xf32>
        %c0_39 = arith.constant 0 : index
        %c0_40 = arith.constant 0 : index
        %61 = vector.load %arg9[%c0_39, %c0_40] : memref<128x1xf32, #tpu.memory_space<vmem>>, vector<128x1xf32>
        tpu.vector_store %arg9[%c0_39, %c0_40], %60 {strides = array<i32>} : memref<128x1xf32, #tpu.memory_space<vmem>>, vector<128x1xf32>,
        %cst_41 = arith.constant 0.000000e+00 : f32
        %62 = vector.broadcast %cst_41 : f32 to vector<128x1xf32>
        %c0_42 = arith.constant 0 : index
        %c0_43 = arith.constant 0 : index
        %63 = vector.load %arg10[%c0_42, %c0_43] : memref<128x1xf32, #tpu.memory_space<vmem>>, vector<128x1xf32>
        tpu.vector_store %arg10[%c0_42, %c0_43], %62 {strides = array<i32>} : memref<128x1xf32, #tpu.memory_space<vmem>>, vector<128x1xf32>,
      } else {
      }
      %c0_18 = arith.constant 0 : index
      %c0_19 = arith.constant 0 : index
      %33 = vector.load %arg8[%c0_18, %c0_19] : memref<128x1xf32, #tpu.memory_space<vmem>>, vector<128x1xf32>
      %34 = vector.broadcast %33 : vector<128x1xf32> to vector<128x128xf32>
      %35 = arith.mulf %21, %34 : vector<128x128xf32>
      %c0_20 = arith.constant 0 : index
      %c0_21 = arith.constant 0 : index
      %36 = vector.load %arg9[%c0_20, %c0_21] : memref<128x1xf32, #tpu.memory_space<vmem>>, vector<128x1xf32>
      %37 = vector.broadcast %36 : vector<128x1xf32> to vector<128x128xf32>
      %38 = arith.mulf %23, %37 : vector<128x128xf32>
      %cst_22 = arith.constant 1.000000e-07 : f32
      %39 = vector.broadcast %cst_22 : f32 to vector<128x128xf32>
      %40 = arith.addf %38, %39 : vector<128x128xf32>
      %cst_23 = arith.constant 1.000000e-07 : f32
      %41 = vector.broadcast %cst_23 : f32 to vector<128x128xf32>
      %42 = arith.addf %35, %41 : vector<128x128xf32>
      %43 = arith.divf %40, %42 : vector<128x128xf32>
      %c0_24 = arith.constant 0 : index
      %c0_25 = arith.constant 0 : index
      %44 = vector.load %arg10[%c0_24, %c0_25] : memref<128x1xf32, #tpu.memory_space<vmem>>, vector<128x1xf32>
      %45 = math.log %43 : vector<128x128xf32>
      %46 = arith.mulf %38, %45 : vector<128x128xf32>
      %cst_26 = arith.constant dense<0.000000e+00> : vector<128xf32>
      %47 = vector.multi_reduction <add>, %46, %cst_26 [1] : vector<128x128xf32> to vector<128xf32>
      %48 = vector.shape_cast %47 : vector<128xf32> to vector<128x1xf32>
      %49 = arith.addf %44, %48 : vector<128x1xf32>
      %c0_27 = arith.constant 0 : index
      %c0_28 = arith.constant 0 : index
      %50 = vector.load %arg10[%c0_27, %c0_28] : memref<128x1xf32, #tpu.memory_space<vmem>>, vector<128x1xf32>
      tpu.vector_store %arg10[%c0_27, %c0_28], %49 {strides = array<i32>} : memref<128x1xf32, #tpu.memory_space<vmem>>, vector<128x1xf32>,
      %c0_i32_29 = arith.constant 0 : i32
      %51 = arith.cmpi eq, %arg2, %c0_i32_29 : i32
      %52 = arith.extui %51 : i1 to i32
      %c0_i32_30 = arith.constant 0 : i32
      %53 = arith.cmpi ne, %52, %c0_i32_30 : i32
      scf.if %53 {
        %c0_31 = arith.constant 0 : index
        %c0_32 = arith.constant 0 : index
        %54 = vector.load %arg10[%c0_31, %c0_32] : memref<128x1xf32, #tpu.memory_space<vmem>>, vector<128x1xf32>
        %c128_i32_33 = arith.constant 128 : i32
        %55 = arith.muli %arg0, %c128_i32_33 : i32
        %56 = tpu.iota {dimensions = array<i32: 0>} : vector<128x1xi32>
        %57 = vector.broadcast %55 : i32 to vector<128x1xi32>
        %58 = arith.addi %57, %56 : vector<128x1xi32>
        %c8_i32_34 = arith.constant 8 : i32
        %59 = vector.broadcast %c8_i32_34 : i32 to vector<128x1xi32>
        %60 = arith.cmpi slt, %58, %59 : vector<128x1xi32>
        %cst_35 = arith.constant 0.000000e+00 : f32
        %61 = vector.broadcast %cst_35 : f32 to vector<128x1xf32>
        %62 = arith.select %60, %54, %61 : vector<128x1xi1>, vector<128x1xf32>
        %63 = vector.shape_cast %62 : vector<128x1xf32> to vector<1x128x1xf32>
        %cst_36 = arith.constant dense<0.000000e+00> : vector<1xf32>
        %64 = vector.multi_reduction <add>, %63, %cst_36 [1, 2] : vector<1x128x1xf32> to vector<1xf32>
        %65 = vector.shape_cast %64 : vector<1xf32> to vector<1x1x1xf32>
        %66 = vector.extract %65[0, 0, 0] : f32 from vector<1x1x1xf32>
        %67 = vector.broadcast %66 : f32 to vector<1x128xf32>
        %c0_37 = arith.constant 0 : index
        %c0_38 = arith.constant 0 : index
        %68 = vector.load %arg7[%c0_37, %c0_38] : memref<1x128xf32, #tpu.memory_space<vmem>>, vector<1x128xf32>
        tpu.vector_store %arg7[%c0_37, %c0_38], %67 {strides = array<i32>} : memref<1x128xf32, #tpu.memory_space<vmem>>, vector<1x128xf32>,
      } else {
      }
    } else {
    }
    return
  }
  func.func @transform_0(%arg0: i32, %arg1: i32, %arg2: i32) -> (i32, i32) {
    %c0_i32 = arith.constant 0 : i32
    %c0_i32_0 = arith.constant 0 : i32
    return %arg0, %c0_i32 : i32, i32
  }
  func.func @transform_1(%arg0: i32, %arg1: i32, %arg2: i32) -> (i32, i32) {
    %c0_i32 = arith.constant 0 : i32
    %c0_i32_0 = arith.constant 0 : i32
    return %arg0, %c0_i32 : i32, i32
  }
  func.func @transform_2(%arg0: i32, %arg1: i32, %arg2: i32) -> (i32, i32) {
    %c0_i32 = arith.constant 0 : i32
    %c0_i32_0 = arith.constant 0 : i32
    return %arg2, %c0_i32 : i32, i32
  }
  func.func @transform_3(%arg0: i32, %arg1: i32, %arg2: i32) -> (i32, i32) {
    %c0_i32 = arith.constant 0 : i32
    %c0_i32_0 = arith.constant 0 : i32
    return %arg2, %c0_i32 : i32, i32
  }
  func.func @transform_4(%arg0: i32, %arg1: i32, %arg2: i32) -> (i32, i32) {
    %c0_i32 = arith.constant 0 : i32
    %c0_i32_0 = arith.constant 0 : i32
    return %c0_i32, %arg0 : i32, i32
  }
}

</mosaic_0001>

<llo_original>
// kernel: tpu_custom_call.1
$region0: #{tpu_custom_call.1}
  #allocation0 [shape = 'u32[]', space=smem, size = 0x4, offset = 0x4, fixed_abs, tag = 'smem constant byte address 0x4 - core index']
  #allocation1 [shape = 'u32[144,128]{1,0:T(1,128)}', space=vmem, size = 0x12000, scoped, tag = 'internal scratch']
  #allocation2 [shape = 'f32[128,1]{1,0:T(8,128)}', space=vmem, size = 0x10000, scoped, tag = 'scratch operand']
  #allocation3 [shape = 'f32[128,1]{1,0:T(8,128)}', space=vmem, size = 0x10000, scoped, tag = 'scratch operand']
  #allocation4 [shape = 'f32[128,1]{1,0:T(8,128)}', space=vmem, size = 0x10000, scoped, tag = 'scratch operand']
  %s0 = inlined_call_operand.hbm [shape: f32[128,128], index: 0, kind: input, shape index: {}]
  %s1 = inlined_call_operand.hbm [shape: f32[128,128], index: 1, kind: input, shape index: {}]
  %s2 = inlined_call_operand.hbm [shape: f32[128,128], index: 2, kind: input, shape index: {}]
  %s3 = inlined_call_operand.hbm [shape: f32[128,128], index: 3, kind: input, shape index: {}]
  %s4 = inlined_call_operand.hbm [shape: f32[1,128], index: 4, kind: output, shape index: {}]
  %s5 = sld [smem:[#allocation0]]
  $region85: #{tpu_custom_call.1} parent=0
    _
  %s7 = ssub.s32 1, %s5
  %s8 = scalar_select 0, %s7, %s5
  $region1: #{tpu_custom_call.1} parent=0
    #allocation5 [shape = 'u8[65536]{0}', space=vmem, size = 0x10000, scoped, tag = 'input window, operand 0, single buffered']
    #allocation6 [shape = 's32[2]{0}', space=sflag, size = 0x8, scoped, tag = 'scoped memory for tpu_custom_call.1']
    #allocation7 [shape = 's32[2]{0}', space=sflag, size = 0x8, scoped, tag = 'scoped memory for tpu_custom_call.1']
    #allocation8 [shape = 'u8[65536]{0}', space=vmem, size = 0x10000, scoped, tag = 'input window, operand 1, single buffered']
    #allocation9 [shape = 's32[1]{0}', space=sflag, size = 0x4, scoped, tag = 'scoped memory for tpu_custom_call.1']
    #allocation10 [shape = 'u8[65536]{0}', space=vmem, size = 0x10000, scoped, tag = 'input window, operand 2, single buffered']
    #allocation11 [shape = 'u8[65536]{0}', space=vmem, size = 0x10000, scoped, tag = 'input window, operand 3, single buffered']
    #allocation12 [shape = 's32[1]{0}', space=sflag, size = 0x4, scoped, tag = 'scoped memory for tpu_custom_call.1']
    #allocation13 [shape = 'u8[512]{0}', space=vmem, size = 0x400, scoped, tag = 'output window, operand 0, single buffered']
    %9 = vsyncpa [#allocation6], 0
    %10 = vsyncpa [#allocation9], 0
    %11 = vsyncpa [#allocation12], 0
    %12 = vsyncpa [#allocation7], 0
    loop: start=0, step=1, limit=4
    $region2: #{tpu_custom_call.1} parent=1 // loop_pre_header
      _
    $region3: #{tpu_custom_call.1} parent=1 // loop_header
      %s14 = sphi 0, %s18
      %p15 = scmp.ge.s32.totalorder %s14, 4
      %s21 = sphi 0, %s40
      %s22 = sphi 0, %s36
      %s23 = sphi 0, %s32
      %s24 = sphi 0, %s21
      %s25 = sphi 0, %s22
      %s26 = sphi 0, %s23
      %s27 = sphi 0, %s24
      %s28 = sphi 0, %s25
      %s29 = sphi 0, %s26
      %s43 = sphi 0, %s45
      %s46 = sphi 0, %s43
      %s47 = sphi 0, %s46
      %s63 = sphi 0, %s47
      %s69 = sphi 0, %s71
      %s72 = sphi 0, %s69
      %s73 = sphi 0, %s72
      %s89 = sphi 0, %s73
      %s95 = sphi 0, %s97
      %s98 = sphi 0, %s95
      %s99 = sphi 0, %s98
      %s115 = sphi 0, %s99
      %s121 = sphi 0, %s123
      %s124 = sphi 0, %s121
      %s125 = sphi 0, %s124
      %s141 = sphi 0, %s125
      %s147 = sphi 0, %s149
      %s150 = sphi 0, %s147
      %s151 = sphi 0, %s150
      %s167 = sphi 0, %s151
    $region4: #{tpu_custom_call.1} parent=1 // loop_header_branch
      %17 = sbr.rel (%p15) target = $region8
    $region5: #{tpu_custom_call.1} parent=1 // loop_body
      %s19 = ssub.s32 %s14, 1
      %s20 = ssub.s32 %s14, 2
      %s30 = sadd.s32 1, %s23
      %p31 = scmp.ge.s32.totalorder %s30, 1
      %s32 = scalar_select %p31, 0, %s30
      %s33 = sadd.s32 1, %s22
      %s34 = scalar_select %p31, %s33, %s22
      %p35 = scmp.ge.s32.totalorder %s34, 2
      %s36 = scalar_select %p35, 0, %s34
      %s37 = sadd.s32 1, %s21
      %s38 = scalar_select %p35, %s37, %s21
      %p39 = scmp.ge.s32.totalorder %s38, 1
      %s40 = scalar_select %p39, 0, %s38
      %s41 = ssub.s32 %s21, %s40
      %p42 = scmp.eq.s32.totalorder %s41, 0
      %s44 = sadd.s32 %s43, 1
      %s45 = scalar_select %p42, %s43, %s44
      %p48 = pneg %p42
      %p49 = scmp.eq.s32.totalorder %s14, 1
      %p50 = por %p48, %p49
      %p51 = scmp.ne.s32.totalorder %s43, %s46
      %p52 = scmp.eq.s32.totalorder %s14, 0
      %p53 = por %p51, %p52
      %p54 = scmp.ne.s32.totalorder %s43, %s46
      %p55 = scmp.eq.s32.totalorder %s19, 1
      %p56 = por %p54, %p55
      %p57 = scmp.ne.s32.totalorder %s46, %s47
      %p58 = scmp.eq.s32.totalorder %s19, 0
      %p59 = por %p57, %p58
      %p60 = scmp.ne.s32.totalorder %s46, %s47
      %p61 = scmp.eq.s32.totalorder %s20, 1
      %p62 = por %p60, %p61
      %p64 = scmp.ne.s32.totalorder %s47, %s63
      %p65 = scmp.eq.s32.totalorder %s20, 0
      %p66 = por %p64, %p65
      %s67 = ssub.s32 %s21, %s40
      %p68 = scmp.eq.s32.totalorder %s67, 0
      %s70 = sadd.s32 %s69, 1
      %s71 = scalar_select %p68, %s69, %s70
      %p74 = pneg %p68
      %p75 = scmp.eq.s32.totalorder %s14, 1
      %p76 = por %p74, %p75
      %p77 = scmp.ne.s32.totalorder %s69, %s72
      %p78 = scmp.eq.s32.totalorder %s14, 0
      %p79 = por %p77, %p78
      %p80 = scmp.ne.s32.totalorder %s69, %s72
      %p81 = scmp.eq.s32.totalorder %s19, 1
      %p82 = por %p80, %p81
      %p83 = scmp.ne.s32.totalorder %s72, %s73
      %p84 = scmp.eq.s32.totalorder %s19, 0
      %p85 = por %p83, %p84
      %p86 = scmp.ne.s32.totalorder %s72, %s73
      %p87 = scmp.eq.s32.totalorder %s20, 1
      %p88 = por %p86, %p87
      %p90 = scmp.ne.s32.totalorder %s73, %s89
      %p91 = scmp.eq.s32.totalorder %s20, 0
      %p92 = por %p90, %p91
      %s93 = ssub.s32 %s23, %s32
      %p94 = scmp.eq.s32.totalorder %s93, 0
      %s96 = sadd.s32 %s95, 1
      %s97 = scalar_select %p94, %s95, %s96
      %p100 = pneg %p94
      %p101 = scmp.eq.s32.totalorder %s14, 1
      %p102 = por %p100, %p101
      %p103 = scmp.ne.s32.totalorder %s95, %s98
      %p104 = scmp.eq.s32.totalorder %s14, 0
      %p105 = por %p103, %p104
      %p106 = scmp.ne.s32.totalorder %s95, %s98
      %p107 = scmp.eq.s32.totalorder %s19, 1
      %p108 = por %p106, %p107
      %p109 = scmp.ne.s32.totalorder %s98, %s99
      %p110 = scmp.eq.s32.totalorder %s19, 0
      %p111 = por %p109, %p110
      %p112 = scmp.ne.s32.totalorder %s98, %s99
      %p113 = scmp.eq.s32.totalorder %s20, 1
      %p114 = por %p112, %p113
      %p116 = scmp.ne.s32.totalorder %s99, %s115
      %p117 = scmp.eq.s32.totalorder %s20, 0
      %p118 = por %p116, %p117
      %s119 = ssub.s32 %s23, %s32
      %p120 = scmp.eq.s32.totalorder %s119, 0
      %s122 = sadd.s32 %s121, 1
      %s123 = scalar_select %p120, %s121, %s122
      %p126 = pneg %p120
      %p127 = scmp.eq.s32.totalorder %s14, 1
      %p128 = por %p126, %p127
      %p129 = scmp.ne.s32.totalorder %s121, %s124
      %p130 = scmp.eq.s32.totalorder %s14, 0
      %p131 = por %p129, %p130
      %p132 = scmp.ne.s32.totalorder %s121, %s124
      %p133 = scmp.eq.s32.totalorder %s19, 1
      %p134 = por %p132, %p133
      %p135 = scmp.ne.s32.totalorder %s124, %s125
      %p136 = scmp.eq.s32.totalorder %s19, 0
      %p137 = por %p135, %p136
      %p138 = scmp.ne.s32.totalorder %s124, %s125
      %p139 = scmp.eq.s32.totalorder %s20, 1
      %p140 = por %p138, %p139
      %p142 = scmp.ne.s32.totalorder %s125, %s141
      %p143 = scmp.eq.s32.totalorder %s20, 0
      %p144 = por %p142, %p143
      %s145 = ssub.s32 %s21, %s40
      %p146 = scmp.eq.s32.totalorder %s145, 0
      %s148 = sadd.s32 %s147, 1
      %s149 = scalar_select %p146, %s147, %s148
      %p152 = pneg %p146
      %p153 = scmp.eq.s32.totalorder %s14, 1
      %p154 = por %p152, %p153
      %p155 = scmp.ne.s32.totalorder %s147, %s150
      %p156 = scmp.eq.s32.totalorder %s14, 0
      %p157 = por %p155, %p156
      %p158 = scmp.ne.s32.totalorder %s147, %s150
      %p159 = scmp.eq.s32.totalorder %s19, 1
      %p160 = por %p158, %p159
      %p161 = scmp.ne.s32.totalorder %s150, %s151
      %p162 = scmp.eq.s32.totalorder %s19, 0
      %p163 = por %p161, %p162
      %p164 = scmp.ne.s32.totalorder %s150, %s151
      %p165 = scmp.eq.s32.totalorder %s20, 1
      %p166 = por %p164, %p165
      %p168 = scmp.ne.s32.totalorder %s151, %s167
      %p169 = scmp.eq.s32.totalorder %s20, 0
      %p170 = por %p168, %p169
      %p171 = scmp.le.s32.totalorder 1, %s14
      %p172 = scmp.lt.s32.totalorder %s14, 3
      %p173 = pnand %p171, %p172
      %p174 = pneg %p173
      // Predicated region
      $region9: #{tpu_custom_call.1} parent=5 // pred_check
        _
      $region10: #{tpu_custom_call.1} parent=5 // pred_check_branch
        %176 = sbr.rel (%p173) target = $region12
      $region11: #{tpu_custom_call.1} parent=5 // pred_region
        %s177 = ssub.s32 %s14, 1
        // Predicated region
        $region13: #{tpu_custom_call.1} parent=11 // pred_check
          %p178 = pneg %p59
        $region14: #{tpu_custom_call.1} parent=11 // pred_check_branch
          %180 = sbr.rel (%p178) target = $region16
        $region15: #{tpu_custom_call.1} parent=11 // pred_region
          %s181 = smul.u32 16, %s24
          %s183 = ssub.s32 2048, 2048
          %184 = vsyncadd [#allocation6], %s183
          %s185 = smul.addr %s181, 128
          %s186 = scalar_lea.hbm %s0, %s185
          %s187 = sshll.u32 [#allocation5], 4
          %s188 = int_to_ptr.vmem [resolvable:$true] %s187
          %193 = dma.hbm_to_vmem [thread:$0]  %s186, 2048, %s188, [#allocation6], 128, 128, 8
        $region16: #{tpu_custom_call.1} parent=11 // pred_fallthru
          _
        // Predicated region
        $region17: #{tpu_custom_call.1} parent=11 // pred_check
          %p194 = pneg %p85
        $region18: #{tpu_custom_call.1} parent=11 // pred_check_branch
          %196 = sbr.rel (%p194) target = $region20
        $region19: #{tpu_custom_call.1} parent=11 // pred_region
          %s197 = smul.u32 16, %s24
          %s199 = ssub.s32 2048, 2048
          %200 = vsyncadd [#allocation9], %s199
          %s201 = smul.addr %s197, 128
          %s202 = scalar_lea.hbm %s1, %s201
          %s203 = sshll.u32 [#allocation8], 4
          %s204 = int_to_ptr.vmem [resolvable:$true] %s203
          %209 = dma.hbm_to_vmem [thread:$0]  %s202, 2048, %s204, [#allocation9], 128, 128, 8
        $region20: #{tpu_custom_call.1} parent=11 // pred_fallthru
          _
        // Predicated region
        $region21: #{tpu_custom_call.1} parent=11 // pred_check
          %p210 = pneg %p111
        $region22: #{tpu_custom_call.1} parent=11 // pred_check_branch
          %212 = sbr.rel (%p210) target = $region24
        $region23: #{tpu_custom_call.1} parent=11 // pred_region
          %s213 = smul.u32 16, %s26
          %s215 = ssub.s32 2048, 2048
          %216 = vsyncadd [#allocation9], %s215
          %s217 = smul.addr %s213, 128
          %s218 = scalar_lea.hbm %s2, %s217
          %s219 = sshll.u32 [#allocation10], 4
          %s220 = int_to_ptr.vmem [resolvable:$true] %s219
          %225 = dma.hbm_to_vmem [thread:$0]  %s218, 2048, %s220, [#allocation9], 128, 128, 8
        $region24: #{tpu_custom_call.1} parent=11 // pred_fallthru
          _
        // Predicated region
        $region25: #{tpu_custom_call.1} parent=11 // pred_check
          %p226 = pneg %p137
        $region26: #{tpu_custom_call.1} parent=11 // pred_check_branch
          %228 = sbr.rel (%p226) target = $region28
        $region27: #{tpu_custom_call.1} parent=11 // pred_region
          %s229 = smul.u32 16, %s26
          %s231 = ssub.s32 2048, 2048
          %232 = vsyncadd [#allocation12], %s231
          %s233 = smul.addr %s229, 128
          %s234 = scalar_lea.hbm %s3, %s233
          %s235 = sshll.u32 [#allocation11], 4
          %s236 = int_to_ptr.vmem [resolvable:$true] %s235
          %241 = dma.hbm_to_vmem [thread:$0]  %s234, 2048, %s236, [#allocation12], 128, 128, 8
        $region28: #{tpu_custom_call.1} parent=11 // pred_fallthru
          _
      $region12: #{tpu_custom_call.1} parent=5 // pred_fallthru
        _
      %p242 = scmp.lt.s32.totalorder %s14, 2
      // Predicated region
      $region29: #{tpu_custom_call.1} parent=5 // pred_check
        %p243 = pneg %p242
      $region30: #{tpu_custom_call.1} parent=5 // pred_check_branch
        %245 = sbr.rel (%p243) target = $region32
      $region31: #{tpu_custom_call.1} parent=5 // pred_region
        _
      $region32: #{tpu_custom_call.1} parent=5 // pred_fallthru
        _
      %p246 = scmp.le.s32.totalorder 1, %s14
      %p247 = scmp.lt.s32.totalorder %s14, 3
      %p248 = pnand %p246, %p247
      %p249 = pneg %p248
      // Predicated region
      $region33: #{tpu_custom_call.1} parent=5 // pred_check
        _
      $region34: #{tpu_custom_call.1} parent=5 // pred_check_branch
        %251 = sbr.rel (%p248) target = $region36
      $region35: #{tpu_custom_call.1} parent=5 // pred_region
        %s252 = ssub.s32 %s14, 1
        // Predicated region
        $region37: #{tpu_custom_call.1} parent=35 // pred_check
          %p253 = pneg %p59
        $region38: #{tpu_custom_call.1} parent=35 // pred_check_branch
          %255 = sbr.rel (%p253) target = $region40
        $region39: #{tpu_custom_call.1} parent=35 // pred_region
          %256 = dma.done [#allocation6], 2048
        $region40: #{tpu_custom_call.1} parent=35 // pred_fallthru
          _
        // Predicated region
        $region41: #{tpu_custom_call.1} parent=35 // pred_check
          %p257 = pneg %p85
        $region42: #{tpu_custom_call.1} parent=35 // pred_check_branch
          %259 = sbr.rel (%p257) target = $region44
        $region43: #{tpu_custom_call.1} parent=35 // pred_region
          %260 = dma.done [#allocation9], 2048
        $region44: #{tpu_custom_call.1} parent=35 // pred_fallthru
          _
        // Predicated region
        $region45: #{tpu_custom_call.1} parent=35 // pred_check
          %p261 = pneg %p111
        $region46: #{tpu_custom_call.1} parent=35 // pred_check_branch
          %263 = sbr.rel (%p261) target = $region48
        $region47: #{tpu_custom_call.1} parent=35 // pred_region
          %264 = dma.done [#allocation9], 2048
        $region48: #{tpu_custom_call.1} parent=35 // pred_fallthru
          _
        // Predicated region
        $region49: #{tpu_custom_call.1} parent=35 // pred_check
          %p265 = pneg %p137
        $region50: #{tpu_custom_call.1} parent=35 // pred_check_branch
          %267 = sbr.rel (%p265) target = $region52
        $region51: #{tpu_custom_call.1} parent=35 // pred_region
          %268 = dma.done [#allocation12], 2048
        $region52: #{tpu_custom_call.1} parent=35 // pred_fallthru
          _
        %p269 = pneg %p59
        %p270 = pneg %p56
        %p271 = pneg %p85
        %p272 = pneg %p82
        %p273 = pneg %p111
        %p274 = pneg %p108
        %p275 = pneg %p137
        %p276 = pneg %p134
        %p277 = pneg %p163
        %p278 = pneg %p160
        %s279 = smul.u32 16, %s24
        %s280 = smul.u32 16, %s24
        %s281 = smul.u32 16, %s26
        %s282 = smul.u32 16, %s26
        %v283 = vld [vmem:[#allocation5] sm:$0xff]
        %v284 = vld [vmem:[#allocation5 + $0x8] sm:$0xff]
        %v285 = vld [vmem:[#allocation5 + $0x10] sm:$0xff]
        %v286 = vld [vmem:[#allocation5 + $0x18] sm:$0xff]
        %v287 = vld [vmem:[#allocation5 + $0x20] sm:$0xff]
        %v288 = vld [vmem:[#allocation5 + $0x28] sm:$0xff]
        %v289 = vld [vmem:[#allocation5 + $0x30] sm:$0xff]
        %v290 = vld [vmem:[#allocation5 + $0x38] sm:$0xff]
        %v291 = vld [vmem:[#allocation5 + $0x40] sm:$0xff]
        %v292 = vld [vmem:[#allocation5 + $0x48] sm:$0xff]
        %v293 = vld [vmem:[#allocation5 + $0x50] sm:$0xff]
        %v294 = vld [vmem:[#allocation5 + $0x58] sm:$0xff]
        %v295 = vld [vmem:[#allocation5 + $0x60] sm:$0xff]
        %v296 = vld [vmem:[#allocation5 + $0x68] sm:$0xff]
        %v297 = vld [vmem:[#allocation5 + $0x70] sm:$0xff]
        %v298 = vld [vmem:[#allocation5 + $0x78] sm:$0xff]
        %v299 = vld [vmem:[#allocation10] sm:$0xff]
        %v300 = vld [vmem:[#allocation10 + $0x8] sm:$0xff]
        %v301 = vld [vmem:[#allocation10 + $0x10] sm:$0xff]
        %v302 = vld [vmem:[#allocation10 + $0x18] sm:$0xff]
        %v303 = vld [vmem:[#allocation10 + $0x20] sm:$0xff]
        %v304 = vld [vmem:[#allocation10 + $0x28] sm:$0xff]
        %v305 = vld [vmem:[#allocation10 + $0x30] sm:$0xff]
        %v306 = vld [vmem:[#allocation10 + $0x38] sm:$0xff]
        %v307 = vld [vmem:[#allocation10 + $0x40] sm:$0xff]
        %v308 = vld [vmem:[#allocation10 + $0x48] sm:$0xff]
        %v309 = vld [vmem:[#allocation10 + $0x50] sm:$0xff]
        %v310 = vld [vmem:[#allocation10 + $0x58] sm:$0xff]
        %v311 = vld [vmem:[#allocation10 + $0x60] sm:$0xff]
        %v312 = vld [vmem:[#allocation10 + $0x68] sm:$0xff]
        %v313 = vld [vmem:[#allocation10 + $0x70] sm:$0xff]
        %v314 = vld [vmem:[#allocation10 + $0x78] sm:$0xff]
        %v315 = vld [vmem:[#allocation8] sm:$0xff]
        %v316 = vld [vmem:[#allocation8 + $0x8] sm:$0xff]
        %v317 = vld [vmem:[#allocation8 + $0x10] sm:$0xff]
        %v318 = vld [vmem:[#allocation8 + $0x18] sm:$0xff]
        %v319 = vld [vmem:[#allocation8 + $0x20] sm:$0xff]
        %v320 = vld [vmem:[#allocation8 + $0x28] sm:$0xff]
        %v321 = vld [vmem:[#allocation8 + $0x30] sm:$0xff]
        %v322 = vld [vmem:[#allocation8 + $0x38] sm:$0xff]
        %v323 = vld [vmem:[#allocation8 + $0x40] sm:$0xff]
        %v324 = vld [vmem:[#allocation8 + $0x48] sm:$0xff]
        %v325 = vld [vmem:[#allocation8 + $0x50] sm:$0xff]
        %v326 = vld [vmem:[#allocation8 + $0x58] sm:$0xff]
        %v327 = vld [vmem:[#allocation8 + $0x60] sm:$0xff]
        %v328 = vld [vmem:[#allocation8 + $0x68] sm:$0xff]
        %v329 = vld [vmem:[#allocation8 + $0x70] sm:$0xff]
        %v330 = vld [vmem:[#allocation8 + $0x78] sm:$0xff]
        %v331 = vld [vmem:[#allocation11] sm:$0xff]
        %v332 = vld [vmem:[#allocation11 + $0x8] sm:$0xff]
        %v333 = vld [vmem:[#allocation11 + $0x10] sm:$0xff]
        %v334 = vld [vmem:[#allocation11 + $0x18] sm:$0xff]
        %v335 = vld [vmem:[#allocation11 + $0x20] sm:$0xff]
        %v336 = vld [vmem:[#allocation11 + $0x28] sm:$0xff]
        %v337 = vld [vmem:[#allocation11 + $0x30] sm:$0xff]
        %v338 = vld [vmem:[#allocation11 + $0x38] sm:$0xff]
        %v339 = vld [vmem:[#allocation11 + $0x40] sm:$0xff]
        %v340 = vld [vmem:[#allocation11 + $0x48] sm:$0xff]
        %v341 = vld [vmem:[#allocation11 + $0x50] sm:$0xff]
        %v342 = vld [vmem:[#allocation11 + $0x58] sm:$0xff]
        %v343 = vld [vmem:[#allocation11 + $0x60] sm:$0xff]
        %v344 = vld [vmem:[#allocation11 + $0x68] sm:$0xff]
        %v345 = vld [vmem:[#allocation11 + $0x70] sm:$0xff]
        %v346 = vld [vmem:[#allocation11 + $0x78] sm:$0xff]
        %347 = vmatprep.subr.mxu0 0.0
        %348 = vmatpush1.xpose.msra.mxu0 %v314
        %349 = vmatprep.subr.mxu0 0.0
        %350 = vmatpush1.xpose.msra.mxu0 %v313
        %351 = vmatprep.subr.mxu0 0.0
        %352 = vmatpush1.xpose.msra.mxu0 %v312
        %353 = vmatprep.subr.mxu0 0.0
        %354 = vmatpush1.xpose.msra.mxu0 %v311
        %355 = vmatprep.subr.mxu0 0.0
        %356 = vmatpush1.xpose.msra.mxu0 %v310
        %357 = vmatprep.subr.mxu0 0.0
        %358 = vmatpush1.xpose.msra.mxu0 %v309
        %359 = vmatprep.subr.mxu0 0.0
        %360 = vmatpush1.xpose.msra.mxu0 %v308
        %361 = vmatprep.subr.mxu0 0.0
        %362 = vmatpush1.xpose.msra.mxu0 %v307
        %363 = vmatprep.subr.mxu0 0.0
        %364 = vmatpush1.xpose.msra.mxu0 %v306
        %365 = vmatprep.subr.mxu0 0.0
        %366 = vmatpush1.xpose.msra.mxu0 %v305
        %367 = vmatprep.subr.mxu0 0.0
        %368 = vmatpush1.xpose.msra.mxu0 %v304
        %369 = vmatprep.subr.mxu0 0.0
        %370 = vmatpush1.xpose.msra.mxu0 %v303
        %371 = vmatprep.subr.mxu0 0.0
        %372 = vmatpush1.xpose.msra.mxu0 %v302
        %373 = vmatprep.subr.mxu0 0.0
        %374 = vmatpush1.xpose.msra.mxu0 %v301
        %375 = vmatprep.subr.mxu0 0.0
        %376 = vmatpush1.xpose.msra.mxu0 %v300
        %377 = vmatprep.subr.mxu0 0.0
        %378 = vmatpush1.xpose.msra.mxu0 %v299
        %379 = vmatprep.subr.mxu0 0.0
        %380 = vmatpush2.xpose.msra.mxu0 0.0
        %381 = vmatprep.subr.mxu0 0.0
        %382 = vmatpush2.xpose.msra.mxu0 0.0
        %383 = vmatprep.subr.mxu0 0.0
        %384 = vmatpush2.xpose.msra.mxu0 0.0
        %385 = vmatprep.subr.mxu0 0.0
        %386 = vmatpush2.xpose.msra.mxu0 0.0
        %387 = vmatprep.subr.mxu0 0.0
        %388 = vmatpush2.xpose.msra.mxu0 0.0
        %389 = vmatprep.subr.mxu0 0.0
        %390 = vmatpush2.xpose.msra.mxu0 0.0
        %391 = vmatprep.subr.mxu0 0.0
        %392 = vmatpush2.xpose.msra.mxu0 0.0
        %393 = vmatprep.subr.mxu0 0.0
        %394 = vmatpush2.xpose.msra.mxu0 0.0
        %395 = vmatprep.subr.mxu0 0.0
        %396 = vmatpush2.xpose.msra.mxu0 0.0
        %397 = vmatprep.subr.mxu0 0.0
        %398 = vmatpush2.xpose.msra.mxu0 0.0
        %399 = vmatprep.subr.mxu0 0.0
        %400 = vmatpush2.xpose.msra.mxu0 0.0
        %401 = vmatprep.subr.mxu0 0.0
        %402 = vmatpush2.xpose.msra.mxu0 0.0
        %403 = vmatprep.subr.mxu0 0.0
        %404 = vmatpush2.xpose.msra.mxu0 0.0
        %405 = vmatprep.subr.mxu0 0.0
        %406 = vmatpush2.xpose.msra.mxu0 0.0
        %407 = vmatprep.subr.mxu0 0.0
        %408 = vmatpush2.xpose.msra.mxu0 0.0
        %409 = vmatprep.subr.mxu0 0.0
        %410 = vmatpush2.xpose.msra.mxu0 0.0
        %411 = vmatprep.mubr.f32.mxu0 0.0
        %412 = vmatmul.mubr.f32.gmra.mxu0 %v283
        %v413 = vpop.f32.mrf.mxu0
        %v414 = vadd.f32 1.0, %v413
        %v415 = vpop.f32.mrf.mxu0
        %416 = vmatprep.mubr.f32.mxu0 0.0
        %417 = vmatmul.mubr.f32.gmra.mxu0 %v284
        %v418 = vpop.f32.mrf.mxu0
        %v419 = vadd.f32 1.0, %v418
        %v420 = vpop.f32.mrf.mxu0
        %421 = vmatprep.mubr.f32.mxu0 0.0
        %422 = vmatmul.mubr.f32.gmra.mxu0 %v285
        %v423 = vpop.f32.mrf.mxu0
        %v424 = vadd.f32 1.0, %v423
        %v425 = vpop.f32.mrf.mxu0
        %426 = vmatprep.mubr.f32.mxu0 0.0
        %427 = vmatmul.mubr.f32.gmra.mxu0 %v286
        %v428 = vpop.f32.mrf.mxu0
        %v429 = vadd.f32 1.0, %v428
        %v430 = vpop.f32.mrf.mxu0
        %431 = vmatprep.mubr.f32.mxu0 0.0
        %432 = vmatmul.mubr.f32.gmra.mxu0 %v287
        %v433 = vpop.f32.mrf.mxu0
        %v434 = vadd.f32 1.0, %v433
        %v435 = vpop.f32.mrf.mxu0
        %436 = vmatprep.mubr.f32.mxu0 0.0
        %437 = vmatmul.mubr.f32.gmra.mxu0 %v288
        %v438 = vpop.f32.mrf.mxu0
        %v439 = vadd.f32 1.0, %v438
        %v440 = vpop.f32.mrf.mxu0
        %441 = vmatprep.mubr.f32.mxu0 0.0
        %442 = vmatmul.mubr.f32.gmra.mxu0 %v289
        %v443 = vpop.f32.mrf.mxu0
        %v444 = vadd.f32 1.0, %v443
        %v445 = vpop.f32.mrf.mxu0
        %446 = vmatprep.mubr.f32.mxu0 0.0
        %447 = vmatmul.mubr.f32.gmra.mxu0 %v290
        %v448 = vpop.f32.mrf.mxu0
        %v449 = vadd.f32 1.0, %v448
        %v450 = vpop.f32.mrf.mxu0
        %451 = vmatprep.mubr.f32.mxu0 0.0
        %452 = vmatmul.mubr.f32.gmra.mxu0 %v291
        %v453 = vpop.f32.mrf.mxu0
        %v454 = vadd.f32 1.0, %v453
        %v455 = vpop.f32.mrf.mxu0
        %456 = vmatprep.mubr.f32.mxu0 0.0
        %457 = vmatmul.mubr.f32.gmra.mxu0 %v292
        %v458 = vpop.f32.mrf.mxu0
        %v459 = vadd.f32 1.0, %v458
        %v460 = vpop.f32.mrf.mxu0
        %461 = vmatprep.mubr.f32.mxu0 0.0
        %462 = vmatmul.mubr.f32.gmra.mxu0 %v293
        %v463 = vpop.f32.mrf.mxu0
        %v464 = vadd.f32 1.0, %v463
        %v465 = vpop.f32.mrf.mxu0
        %466 = vmatprep.mubr.f32.mxu0 0.0
        %467 = vmatmul.mubr.f32.gmra.mxu0 %v294
        %v468 = vpop.f32.mrf.mxu0
        %v469 = vadd.f32 1.0, %v468
        %v470 = vpop.f32.mrf.mxu0
        %471 = vmatprep.mubr.f32.mxu0 0.0
        %472 = vmatmul.mubr.f32.gmra.mxu0 %v295
        %v473 = vpop.f32.mrf.mxu0
        %v474 = vadd.f32 1.0, %v473
        %v475 = vpop.f32.mrf.mxu0
        %476 = vmatprep.mubr.f32.mxu0 0.0
        %477 = vmatmul.mubr.f32.gmra.mxu0 %v296
        %v478 = vpop.f32.mrf.mxu0
        %v479 = vadd.f32 1.0, %v478
        %v480 = vpop.f32.mrf.mxu0
        %481 = vmatprep.mubr.f32.mxu0 0.0
        %482 = vmatmul.mubr.f32.gmra.mxu0 %v297
        %v483 = vpop.f32.mrf.mxu0
        %v484 = vadd.f32 1.0, %v483
        %v485 = vpop.f32.mrf.mxu0
        %486 = vmatprep.mubr.f32.mxu0 0.0
        %487 = vmatmul.mubr.f32.gmra.mxu0 %v298
        %v488 = vpop.f32.mrf.mxu0
        %v489 = vadd.f32 1.0, %v488
        %v490 = vpop.f32.mrf.mxu0
        %491 = vdwg.mxu0
        %v492 = vmul.f32 %v414, 0.5
        %v493 = vmul.f32 %v419, 0.5
        %v494 = vmul.f32 %v424, 0.5
        %v495 = vmul.f32 %v429, 0.5
        %v496 = vmul.f32 %v434, 0.5
        %v497 = vmul.f32 %v439, 0.5
        %v498 = vmul.f32 %v444, 0.5
        %v499 = vmul.f32 %v449, 0.5
        %v500 = vmul.f32 %v454, 0.5
        %v501 = vmul.f32 %v459, 0.5
        %v502 = vmul.f32 %v464, 0.5
        %v503 = vmul.f32 %v469, 0.5
        %v504 = vmul.f32 %v474, 0.5
        %v505 = vmul.f32 %v479, 0.5
        %v506 = vmul.f32 %v484, 0.5
        %v507 = vmul.f32 %v489, 0.5
        %508 = vmatprep.subr.mxu0 0.0
        %509 = vmatpush1.xpose.msra.mxu0 %v346
        %510 = vmatprep.subr.mxu0 0.0
        %511 = vmatpush1.xpose.msra.mxu0 %v345
        %512 = vmatprep.subr.mxu0 0.0
        %513 = vmatpush1.xpose.msra.mxu0 %v344
        %514 = vmatprep.subr.mxu0 0.0
        %515 = vmatpush1.xpose.msra.mxu0 %v343
        %516 = vmatprep.subr.mxu0 0.0
        %517 = vmatpush1.xpose.msra.mxu0 %v342
        %518 = vmatprep.subr.mxu0 0.0
        %519 = vmatpush1.xpose.msra.mxu0 %v341
        %520 = vmatprep.subr.mxu0 0.0
        %521 = vmatpush1.xpose.msra.mxu0 %v340
        %522 = vmatprep.subr.mxu0 0.0
        %523 = vmatpush1.xpose.msra.mxu0 %v339
        %524 = vmatprep.subr.mxu0 0.0
        %525 = vmatpush1.xpose.msra.mxu0 %v338
        %526 = vmatprep.subr.mxu0 0.0
        %527 = vmatpush1.xpose.msra.mxu0 %v337
        %528 = vmatprep.subr.mxu0 0.0
        %529 = vmatpush1.xpose.msra.mxu0 %v336
        %530 = vmatprep.subr.mxu0 0.0
        %531 = vmatpush1.xpose.msra.mxu0 %v335
        %532 = vmatprep.subr.mxu0 0.0
        %533 = vmatpush1.xpose.msra.mxu0 %v334
        %534 = vmatprep.subr.mxu0 0.0
        %535 = vmatpush1.xpose.msra.mxu0 %v333
        %536 = vmatprep.subr.mxu0 0.0
        %537 = vmatpush1.xpose.msra.mxu0 %v332
        %538 = vmatprep.subr.mxu0 0.0
        %539 = vmatpush1.xpose.msra.mxu0 %v331
        %540 = vmatprep.subr.mxu0 0.0
        %541 = vmatpush2.xpose.msra.mxu0 0.0
        %542 = vmatprep.subr.mxu0 0.0
        %543 = vmatpush2.xpose.msra.mxu0 0.0
        %544 = vmatprep.subr.mxu0 0.0
        %545 = vmatpush2.xpose.msra.mxu0 0.0
        %546 = vmatprep.subr.mxu0 0.0
        %547 = vmatpush2.xpose.msra.mxu0 0.0
        %548 = vmatprep.subr.mxu0 0.0
        %549 = vmatpush2.xpose.msra.mxu0 0.0
        %550 = vmatprep.subr.mxu0 0.0
        %551 = vmatpush2.xpose.msra.mxu0 0.0
        %552 = vmatprep.subr.mxu0 0.0
        %553 = vmatpush2.xpose.msra.mxu0 0.0
        %554 = vmatprep.subr.mxu0 0.0
        %555 = vmatpush2.xpose.msra.mxu0 0.0
        %556 = vmatprep.subr.mxu0 0.0
        %557 = vmatpush2.xpose.msra.mxu0 0.0
        %558 = vmatprep.subr.mxu0 0.0
        %559 = vmatpush2.xpose.msra.mxu0 0.0
        %560 = vmatprep.subr.mxu0 0.0
        %561 = vmatpush2.xpose.msra.mxu0 0.0
        %562 = vmatprep.subr.mxu0 0.0
        %563 = vmatpush2.xpose.msra.mxu0 0.0
        %564 = vmatprep.subr.mxu0 0.0
        %565 = vmatpush2.xpose.msra.mxu0 0.0
        %566 = vmatprep.subr.mxu0 0.0
        %567 = vmatpush2.xpose.msra.mxu0 0.0
        %568 = vmatprep.subr.mxu0 0.0
        %569 = vmatpush2.xpose.msra.mxu0 0.0
        %570 = vmatprep.subr.mxu0 0.0
        %571 = vmatpush2.xpose.msra.mxu0 0.0
        %572 = vmatprep.mubr.f32.mxu0 0.0
        %573 = vmatmul.mubr.f32.gmra.mxu0 %v315
        %v574 = vpop.f32.mrf.mxu0
        %v575 = vadd.f32 1.0, %v574
        %v576 = vpop.f32.mrf.mxu0
        %577 = vmatprep.mubr.f32.mxu0 0.0
        %578 = vmatmul.mubr.f32.gmra.mxu0 %v316
        %v579 = vpop.f32.mrf.mxu0
        %v580 = vadd.f32 1.0, %v579
        %v581 = vpop.f32.mrf.mxu0
        %582 = vmatprep.mubr.f32.mxu0 0.0
        %583 = vmatmul.mubr.f32.gmra.mxu0 %v317
        %v584 = vpop.f32.mrf.mxu0
        %v585 = vadd.f32 1.0, %v584
        %v586 = vpop.f32.mrf.mxu0
        %587 = vmatprep.mubr.f32.mxu0 0.0
        %588 = vmatmul.mubr.f32.gmra.mxu0 %v318
        %v589 = vpop.f32.mrf.mxu0
        %v590 = vadd.f32 1.0, %v589
        %v591 = vpop.f32.mrf.mxu0
        %592 = vmatprep.mubr.f32.mxu0 0.0
        %593 = vmatmul.mubr.f32.gmra.mxu0 %v319
        %v594 = vpop.f32.mrf.mxu0
        %v595 = vadd.f32 1.0, %v594
        %v596 = vpop.f32.mrf.mxu0
        %597 = vmatprep.mubr.f32.mxu0 0.0
        %598 = vmatmul.mubr.f32.gmra.mxu0 %v320
        %v599 = vpop.f32.mrf.mxu0
        %v600 = vadd.f32 1.0, %v599
        %v601 = vpop.f32.mrf.mxu0
        %602 = vmatprep.mubr.f32.mxu0 0.0
        %603 = vmatmul.mubr.f32.gmra.mxu0 %v321
        %v604 = vpop.f32.mrf.mxu0
        %v605 = vadd.f32 1.0, %v604
        %v606 = vpop.f32.mrf.mxu0
        %607 = vmatprep.mubr.f32.mxu0 0.0
        %608 = vmatmul.mubr.f32.gmra.mxu0 %v322
        %v609 = vpop.f32.mrf.mxu0
        %v610 = vadd.f32 1.0, %v609
        %v611 = vpop.f32.mrf.mxu0
        %612 = vmatprep.mubr.f32.mxu0 0.0
        %613 = vmatmul.mubr.f32.gmra.mxu0 %v323
        %v614 = vpop.f32.mrf.mxu0
        %v615 = vadd.f32 1.0, %v614
        %v616 = vpop.f32.mrf.mxu0
        %617 = vmatprep.mubr.f32.mxu0 0.0
        %618 = vmatmul.mubr.f32.gmra.mxu0 %v324
        %v619 = vpop.f32.mrf.mxu0
        %v620 = vadd.f32 1.0, %v619
        %v621 = vpop.f32.mrf.mxu0
        %622 = vmatprep.mubr.f32.mxu0 0.0
        %623 = vmatmul.mubr.f32.gmra.mxu0 %v325
        %v624 = vpop.f32.mrf.mxu0
        %v625 = vadd.f32 1.0, %v624
        %v626 = vpop.f32.mrf.mxu0
        %627 = vmatprep.mubr.f32.mxu0 0.0
        %628 = vmatmul.mubr.f32.gmra.mxu0 %v326
        %v629 = vpop.f32.mrf.mxu0
        %v630 = vadd.f32 1.0, %v629
        %v631 = vpop.f32.mrf.mxu0
        %632 = vmatprep.mubr.f32.mxu0 0.0
        %633 = vmatmul.mubr.f32.gmra.mxu0 %v327
        %v634 = vpop.f32.mrf.mxu0
        %v635 = vadd.f32 1.0, %v634
        %v636 = vpop.f32.mrf.mxu0
        %637 = vmatprep.mubr.f32.mxu0 0.0
        %638 = vmatmul.mubr.f32.gmra.mxu0 %v328
        %v639 = vpop.f32.mrf.mxu0
        %v640 = vadd.f32 1.0, %v639
        %v641 = vpop.f32.mrf.mxu0
        %642 = vmatprep.mubr.f32.mxu0 0.0
        %643 = vmatmul.mubr.f32.gmra.mxu0 %v329
        %v644 = vpop.f32.mrf.mxu0
        %v645 = vadd.f32 1.0, %v644
        %v646 = vpop.f32.mrf.mxu0
        %647 = vmatprep.mubr.f32.mxu0 0.0
        %648 = vmatmul.mubr.f32.gmra.mxu0 %v330
        %v649 = vpop.f32.mrf.mxu0
        %v650 = vadd.f32 1.0, %v649
        %v651 = vpop.f32.mrf.mxu0
        %652 = vdwg.mxu0
        %v653 = vmul.f32 %v575, 0.5
        %v654 = vmul.f32 %v580, 0.5
        %v655 = vmul.f32 %v585, 0.5
        %v656 = vmul.f32 %v590, 0.5
        %v657 = vmul.f32 %v595, 0.5
        %v658 = vmul.f32 %v600, 0.5
        %v659 = vmul.f32 %v605, 0.5
        %v660 = vmul.f32 %v610, 0.5
        %v661 = vmul.f32 %v615, 0.5
        %v662 = vmul.f32 %v620, 0.5
        %v663 = vmul.f32 %v625, 0.5
        %v664 = vmul.f32 %v630, 0.5
        %v665 = vmul.f32 %v635, 0.5
        %v666 = vmul.f32 %v640, 0.5
        %v667 = vmul.f32 %v645, 0.5
        %v668 = vmul.f32 %v650, 0.5
        %s669 = smul.u32 %s26, 128
        %v670 = vlaneseq
        %v671 = vand.u32 %v670, 127
        %v672 = vstv %s669
        %v673 = vadd.s32 %v672, %v671
        %vm674 = vcmp.lt.s32.totalorder %v673, 8
        %v675 = vsel %vm674, %v492, 0.0
        %v676 = vsel %vm674, %v493, 0.0
        %v677 = vsel %vm674, %v494, 0.0
        %v678 = vsel %vm674, %v495, 0.0
        %v679 = vsel %vm674, %v496, 0.0
        %v680 = vsel %vm674, %v497, 0.0
        %v681 = vsel %vm674, %v498, 0.0
        %v682 = vsel %vm674, %v499, 0.0
        %v683 = vsel %vm674, %v500, 0.0
        %v684 = vsel %vm674, %v501, 0.0
        %v685 = vsel %vm674, %v502, 0.0
        %v686 = vsel %vm674, %v503, 0.0
        %v687 = vsel %vm674, %v504, 0.0
        %v688 = vsel %vm674, %v505, 0.0
        %v689 = vsel %vm674, %v506, 0.0
        %v690 = vsel %vm674, %v507, 0.0
        %v691 = vsel %vm674, %v653, 0.0
        %v692 = vsel %vm674, %v654, 0.0
        %v693 = vsel %vm674, %v655, 0.0
        %v694 = vsel %vm674, %v656, 0.0
        %v695 = vsel %vm674, %v657, 0.0
        %v696 = vsel %vm674, %v658, 0.0
        %v697 = vsel %vm674, %v659, 0.0
        %v698 = vsel %vm674, %v660, 0.0
        %v699 = vsel %vm674, %v661, 0.0
        %v700 = vsel %vm674, %v662, 0.0
        %v701 = vsel %vm674, %v663, 0.0
        %v702 = vsel %vm674, %v664, 0.0
        %v703 = vsel %vm674, %v665, 0.0
        %v704 = vsel %vm674, %v666, 0.0
        %v705 = vsel %vm674, %v667, 0.0
        %v706 = vsel %vm674, %v668, 0.0
        %p707 = scmp.eq.s32.totalorder %s25, 0
        // Predicated region
        $region53: #{tpu_custom_call.1} parent=35 // pred_check
          %p708 = pneg %p707
        $region54: #{tpu_custom_call.1} parent=35 // pred_check_branch
          %710 = sbr.rel (%p708) target = $region56
        $region55: #{tpu_custom_call.1} parent=35 // pred_region
          %p711 = scmp.eq.s32.totalorder %s26, 0
          // Predicated region
          $region57: #{tpu_custom_call.1} parent=55 // pred_check
            %p712 = pneg %p711
          $region58: #{tpu_custom_call.1} parent=55 // pred_check_branch
            %714 = sbr.rel (%p712) target = $region60
          $region59: #{tpu_custom_call.1} parent=55 // pred_region
            %vm715 = vcmask 7168
            %716 = vst.msk [vmem:[#allocation2] sm:$0xff] %vm715, 0.0
            %717 = vst.msk [vmem:[#allocation2 + $0x8] sm:$0xff] %vm715, 0.0
            %718 = vst.msk [vmem:[#allocation2 + $0x10] sm:$0xff] %vm715, 0.0
            %719 = vst.msk [vmem:[#allocation2 + $0x18] sm:$0xff] %vm715, 0.0
            %720 = vst.msk [vmem:[#allocation2 + $0x20] sm:$0xff] %vm715, 0.0
            %721 = vst.msk [vmem:[#allocation2 + $0x28] sm:$0xff] %vm715, 0.0
            %722 = vst.msk [vmem:[#allocation2 + $0x30] sm:$0xff] %vm715, 0.0
            %723 = vst.msk [vmem:[#allocation2 + $0x38] sm:$0xff] %vm715, 0.0
            %724 = vst.msk [vmem:[#allocation2 + $0x40] sm:$0xff] %vm715, 0.0
            %725 = vst.msk [vmem:[#allocation2 + $0x48] sm:$0xff] %vm715, 0.0
            %726 = vst.msk [vmem:[#allocation2 + $0x50] sm:$0xff] %vm715, 0.0
            %727 = vst.msk [vmem:[#allocation2 + $0x58] sm:$0xff] %vm715, 0.0
            %728 = vst.msk [vmem:[#allocation2 + $0x60] sm:$0xff] %vm715, 0.0
            %729 = vst.msk [vmem:[#allocation2 + $0x68] sm:$0xff] %vm715, 0.0
            %730 = vst.msk [vmem:[#allocation2 + $0x70] sm:$0xff] %vm715, 0.0
            %731 = vst.msk [vmem:[#allocation2 + $0x78] sm:$0xff] %vm715, 0.0
            %732 = vst.msk [vmem:[#allocation3] sm:$0xff] %vm715, 0.0
            %733 = vst.msk [vmem:[#allocation3 + $0x8] sm:$0xff] %vm715, 0.0
            %734 = vst.msk [vmem:[#allocation3 + $0x10] sm:$0xff] %vm715, 0.0
            %735 = vst.msk [vmem:[#allocation3 + $0x18] sm:$0xff] %vm715, 0.0
            %736 = vst.msk [vmem:[#allocation3 + $0x20] sm:$0xff] %vm715, 0.0
            %737 = vst.msk [vmem:[#allocation3 + $0x28] sm:$0xff] %vm715, 0.0
            %738 = vst.msk [vmem:[#allocation3 + $0x30] sm:$0xff] %vm715, 0.0
            %739 = vst.msk [vmem:[#allocation3 + $0x38] sm:$0xff] %vm715, 0.0
            %740 = vst.msk [vmem:[#allocation3 + $0x40] sm:$0xff] %vm715, 0.0
            %741 = vst.msk [vmem:[#allocation3 + $0x48] sm:$0xff] %vm715, 0.0
            %742 = vst.msk [vmem:[#allocation3 + $0x50] sm:$0xff] %vm715, 0.0
            %743 = vst.msk [vmem:[#allocation3 + $0x58] sm:$0xff] %vm715, 0.0
            %744 = vst.msk [vmem:[#allocation3 + $0x60] sm:$0xff] %vm715, 0.0
            %745 = vst.msk [vmem:[#allocation3 + $0x68] sm:$0xff] %vm715, 0.0
            %746 = vst.msk [vmem:[#allocation3 + $0x70] sm:$0xff] %vm715, 0.0
            %747 = vst.msk [vmem:[#allocation3 + $0x78] sm:$0xff] %vm715, 0.0
          $region60: #{tpu_custom_call.1} parent=55 // pred_fallthru
            _
          %v748 = vld [vmem:[#allocation2] sm:$0xff]
          %v749 = vld [vmem:[#allocation2 + $0x8] sm:$0xff]
          %v750 = vld [vmem:[#allocation2 + $0x10] sm:$0xff]
          %v751 = vld [vmem:[#allocation2 + $0x18] sm:$0xff]
          %v752 = vld [vmem:[#allocation2 + $0x20] sm:$0xff]
          %v753 = vld [vmem:[#allocation2 + $0x28] sm:$0xff]
          %v754 = vld [vmem:[#allocation2 + $0x30] sm:$0xff]
          %v755 = vld [vmem:[#allocation2 + $0x38] sm:$0xff]
          %v756 = vld [vmem:[#allocation2 + $0x40] sm:$0xff]
          %v757 = vld [vmem:[#allocation2 + $0x48] sm:$0xff]
          %v758 = vld [vmem:[#allocation2 + $0x50] sm:$0xff]
          %v759 = vld [vmem:[#allocation2 + $0x58] sm:$0xff]
          %v760 = vld [vmem:[#allocation2 + $0x60] sm:$0xff]
          %v761 = vld [vmem:[#allocation2 + $0x68] sm:$0xff]
          %v762 = vld [vmem:[#allocation2 + $0x70] sm:$0xff]
          %v763 = vld [vmem:[#allocation2 + $0x78] sm:$0xff]
          %764 = vadd.xlane.f32.xlu0 %v675
          %v765 = vpop.xlane.xlu0 %764
          %766 = vadd.xlane.f32.xlu0 %v676
          %v767 = vpop.xlane.xlu0 %766
          %768 = vadd.xlane.f32.xlu0 %v677
          %v769 = vpop.xlane.xlu0 %768
          %770 = vadd.xlane.f32.xlu0 %v678
          %v771 = vpop.xlane.xlu0 %770
          %772 = vadd.xlane.f32.xlu0 %v679
          %v773 = vpop.xlane.xlu0 %772
          %774 = vadd.xlane.f32.xlu0 %v680
          %v775 = vpop.xlane.xlu0 %774
          %776 = vadd.xlane.f32.xlu0 %v681
          %v777 = vpop.xlane.xlu0 %776
          %778 = vadd.xlane.f32.xlu0 %v682
          %v779 = vpop.xlane.xlu0 %778
          %780 = vadd.xlane.f32.xlu0 %v683
          %v781 = vpop.xlane.xlu0 %780
          %782 = vadd.xlane.f32.xlu0 %v684
          %v783 = vpop.xlane.xlu0 %782
          %784 = vadd.xlane.f32.xlu0 %v685
          %v785 = vpop.xlane.xlu0 %784
          %786 = vadd.xlane.f32.xlu0 %v686
          %v787 = vpop.xlane.xlu0 %786
          %788 = vadd.xlane.f32.xlu0 %v687
          %v789 = vpop.xlane.xlu0 %788
          %790 = vadd.xlane.f32.xlu0 %v688
          %v791 = vpop.xlane.xlu0 %790
          %792 = vadd.xlane.f32.xlu0 %v689
          %v793 = vpop.xlane.xlu0 %792
          %794 = vadd.xlane.f32.xlu0 %v690
          %v795 = vpop.xlane.xlu0 %794
          %v796 = vadd.f32 %v748, %v765
          %v797 = vadd.f32 %v749, %v767
          %v798 = vadd.f32 %v750, %v769
          %v799 = vadd.f32 %v751, %v771
          %v800 = vadd.f32 %v752, %v773
          %v801 = vadd.f32 %v753, %v775
          %v802 = vadd.f32 %v754, %v777
          %v803 = vadd.f32 %v755, %v779
          %v804 = vadd.f32 %v756, %v781
          %v805 = vadd.f32 %v757, %v783
          %v806 = vadd.f32 %v758, %v785
          %v807 = vadd.f32 %v759, %v787
          %v808 = vadd.f32 %v760, %v789
          %v809 = vadd.f32 %v761, %v791
          %v810 = vadd.f32 %v762, %v793
          %v811 = vadd.f32 %v763, %v795
          %vm812 = vcmask 7168
          %813 = vst.msk [vmem:[#allocation2] sm:$0xff] %vm812, %v796
          %814 = vst.msk [vmem:[#allocation2 + $0x8] sm:$0xff] %vm812, %v797
          %815 = vst.msk [vmem:[#allocation2 + $0x10] sm:$0xff] %vm812, %v798
          %816 = vst.msk [vmem:[#allocation2 + $0x18] sm:$0xff] %vm812, %v799
          %817 = vst.msk [vmem:[#allocation2 + $0x20] sm:$0xff] %vm812, %v800
          %818 = vst.msk [vmem:[#allocation2 + $0x28] sm:$0xff] %vm812, %v801
          %819 = vst.msk [vmem:[#allocation2 + $0x30] sm:$0xff] %vm812, %v802
          %820 = vst.msk [vmem:[#allocation2 + $0x38] sm:$0xff] %vm812, %v803
          %821 = vst.msk [vmem:[#allocation2 + $0x40] sm:$0xff] %vm812, %v804
          %822 = vst.msk [vmem:[#allocation2 + $0x48] sm:$0xff] %vm812, %v805
          %823 = vst.msk [vmem:[#allocation2 + $0x50] sm:$0xff] %vm812, %v806
          %824 = vst.msk [vmem:[#allocation2 + $0x58] sm:$0xff] %vm812, %v807
          %825 = vst.msk [vmem:[#allocation2 + $0x60] sm:$0xff] %vm812, %v808
          %826 = vst.msk [vmem:[#allocation2 + $0x68] sm:$0xff] %vm812, %v809
          %827 = vst.msk [vmem:[#allocation2 + $0x70] sm:$0xff] %vm812, %v810
          %828 = vst.msk [vmem:[#allocation2 + $0x78] sm:$0xff] %vm812, %v811
          %v829 = vld [vmem:[#allocation3] sm:$0xff]
          %v830 = vld [vmem:[#allocation3 + $0x8] sm:$0xff]
          %v831 = vld [vmem:[#allocation3 + $0x10] sm:$0xff]
          %v832 = vld [vmem:[#allocation3 + $0x18] sm:$0xff]
          %v833 = vld [vmem:[#allocation3 + $0x20] sm:$0xff]
          %v834 = vld [vmem:[#allocation3 + $0x28] sm:$0xff]
          %v835 = vld [vmem:[#allocation3 + $0x30] sm:$0xff]
          %v836 = vld [vmem:[#allocation3 + $0x38] sm:$0xff]
          %v837 = vld [vmem:[#allocation3 + $0x40] sm:$0xff]
          %v838 = vld [vmem:[#allocation3 + $0x48] sm:$0xff]
          %v839 = vld [vmem:[#allocation3 + $0x50] sm:$0xff]
          %v840 = vld [vmem:[#allocation3 + $0x58] sm:$0xff]
          %v841 = vld [vmem:[#allocation3 + $0x60] sm:$0xff]
          %v842 = vld [vmem:[#allocation3 + $0x68] sm:$0xff]
          %v843 = vld [vmem:[#allocation3 + $0x70] sm:$0xff]
          %v844 = vld [vmem:[#allocation3 + $0x78] sm:$0xff]
          %845 = vadd.xlane.f32.xlu0 %v691
          %v846 = vpop.xlane.xlu0 %845
          %847 = vadd.xlane.f32.xlu0 %v692
          %v848 = vpop.xlane.xlu0 %847
          %849 = vadd.xlane.f32.xlu0 %v693
          %v850 = vpop.xlane.xlu0 %849
          %851 = vadd.xlane.f32.xlu0 %v694
          %v852 = vpop.xlane.xlu0 %851
          %853 = vadd.xlane.f32.xlu0 %v695
          %v854 = vpop.xlane.xlu0 %853
          %855 = vadd.xlane.f32.xlu0 %v696
          %v856 = vpop.xlane.xlu0 %855
          %857 = vadd.xlane.f32.xlu0 %v697
          %v858 = vpop.xlane.xlu0 %857
          %859 = vadd.xlane.f32.xlu0 %v698
          %v860 = vpop.xlane.xlu0 %859
          %861 = vadd.xlane.f32.xlu0 %v699
          %v862 = vpop.xlane.xlu0 %861
          %863 = vadd.xlane.f32.xlu0 %v700
          %v864 = vpop.xlane.xlu0 %863
          %865 = vadd.xlane.f32.xlu0 %v701
          %v866 = vpop.xlane.xlu0 %865
          %867 = vadd.xlane.f32.xlu0 %v702
          %v868 = vpop.xlane.xlu0 %867
          %869 = vadd.xlane.f32.xlu0 %v703
          %v870 = vpop.xlane.xlu0 %869
          %871 = vadd.xlane.f32.xlu0 %v704
          %v872 = vpop.xlane.xlu0 %871
          %873 = vadd.xlane.f32.xlu0 %v705
          %v874 = vpop.xlane.xlu0 %873
          %875 = vadd.xlane.f32.xlu0 %v706
          %v876 = vpop.xlane.xlu0 %875
          %v877 = vadd.f32 %v829, %v846
          %v878 = vadd.f32 %v830, %v848
          %v879 = vadd.f32 %v831, %v850
          %v880 = vadd.f32 %v832, %v852
          %v881 = vadd.f32 %v833, %v854
          %v882 = vadd.f32 %v834, %v856
          %v883 = vadd.f32 %v835, %v858
          %v884 = vadd.f32 %v836, %v860
          %v885 = vadd.f32 %v837, %v862
          %v886 = vadd.f32 %v838, %v864
          %v887 = vadd.f32 %v839, %v866
          %v888 = vadd.f32 %v840, %v868
          %v889 = vadd.f32 %v841, %v870
          %v890 = vadd.f32 %v842, %v872
          %v891 = vadd.f32 %v843, %v874
          %v892 = vadd.f32 %v844, %v876
          %893 = vst.msk [vmem:[#allocation3] sm:$0xff] %vm812, %v877
          %894 = vst.msk [vmem:[#allocation3 + $0x8] sm:$0xff] %vm812, %v878
          %895 = vst.msk [vmem:[#allocation3 + $0x10] sm:$0xff] %vm812, %v879
          %896 = vst.msk [vmem:[#allocation3 + $0x18] sm:$0xff] %vm812, %v880
          %897 = vst.msk [vmem:[#allocation3 + $0x20] sm:$0xff] %vm812, %v881
          %898 = vst.msk [vmem:[#allocation3 + $0x28] sm:$0xff] %vm812, %v882
          %899 = vst.msk [vmem:[#allocation3 + $0x30] sm:$0xff] %vm812, %v883
          %900 = vst.msk [vmem:[#allocation3 + $0x38] sm:$0xff] %vm812, %v884
          %901 = vst.msk [vmem:[#allocation3 + $0x40] sm:$0xff] %vm812, %v885
          %902 = vst.msk [vmem:[#allocation3 + $0x48] sm:$0xff] %vm812, %v886
          %903 = vst.msk [vmem:[#allocation3 + $0x50] sm:$0xff] %vm812, %v887
          %904 = vst.msk [vmem:[#allocation3 + $0x58] sm:$0xff] %vm812, %v888
          %905 = vst.msk [vmem:[#allocation3 + $0x60] sm:$0xff] %vm812, %v889
          %906 = vst.msk [vmem:[#allocation3 + $0x68] sm:$0xff] %vm812, %v890
          %907 = vst.msk [vmem:[#allocation3 + $0x70] sm:$0xff] %vm812, %v891
          %908 = vst.msk [vmem:[#allocation3 + $0x78] sm:$0xff] %vm812, %v892
        $region56: #{tpu_custom_call.1} parent=35 // pred_fallthru
          _
        %p909 = scmp.eq.s32.totalorder %s25, 1
        // Predicated region
        $region61: #{tpu_custom_call.1} parent=35 // pred_check
          %p910 = pneg %p909
        $region62: #{tpu_custom_call.1} parent=35 // pred_check_branch
          %912 = sbr.rel (%p910) target = $region64
        $region63: #{tpu_custom_call.1} parent=35 // pred_region
          %p913 = scmp.eq.s32.totalorder %s26, 0
          // Predicated region
          $region65: #{tpu_custom_call.1} parent=63 // pred_check
            %p914 = pneg %p913
          $region66: #{tpu_custom_call.1} parent=63 // pred_check_branch
            %916 = sbr.rel (%p914) target = $region68
          $region67: #{tpu_custom_call.1} parent=63 // pred_region
            %v917 = vld [vmem:[#allocation2] sm:$0xff]
            %v918 = vld [vmem:[#allocation2 + $0x8] sm:$0xff]
            %v919 = vld [vmem:[#allocation2 + $0x10] sm:$0xff]
            %v920 = vld [vmem:[#allocation2 + $0x18] sm:$0xff]
            %v921 = vld [vmem:[#allocation2 + $0x20] sm:$0xff]
            %v922 = vld [vmem:[#allocation2 + $0x28] sm:$0xff]
            %v923 = vld [vmem:[#allocation2 + $0x30] sm:$0xff]
            %v924 = vld [vmem:[#allocation2 + $0x38] sm:$0xff]
            %v925 = vld [vmem:[#allocation2 + $0x40] sm:$0xff]
            %v926 = vld [vmem:[#allocation2 + $0x48] sm:$0xff]
            %v927 = vld [vmem:[#allocation2 + $0x50] sm:$0xff]
            %v928 = vld [vmem:[#allocation2 + $0x58] sm:$0xff]
            %v929 = vld [vmem:[#allocation2 + $0x60] sm:$0xff]
            %v930 = vld [vmem:[#allocation2 + $0x68] sm:$0xff]
            %v931 = vld [vmem:[#allocation2 + $0x70] sm:$0xff]
            %v932 = vld [vmem:[#allocation2 + $0x78] sm:$0xff]
            %v933 = vrcp.pop %v917
            %v934 = vmul.f32 1.0, %v933
            %v935 = vrcp.pop %v918
            %v936 = vmul.f32 1.0, %v935
            %v937 = vrcp.pop %v919
            %v938 = vmul.f32 1.0, %v937
            %v939 = vrcp.pop %v920
            %v940 = vmul.f32 1.0, %v939
            %v941 = vrcp.pop %v921
            %v942 = vmul.f32 1.0, %v941
            %v943 = vrcp.pop %v922
            %v944 = vmul.f32 1.0, %v943
            %v945 = vrcp.pop %v923
            %v946 = vmul.f32 1.0, %v945
            %v947 = vrcp.pop %v924
            %v948 = vmul.f32 1.0, %v947
            %v949 = vrcp.pop %v925
            %v950 = vmul.f32 1.0, %v949
            %v951 = vrcp.pop %v926
            %v952 = vmul.f32 1.0, %v951
            %v953 = vrcp.pop %v927
            %v954 = vmul.f32 1.0, %v953
            %v955 = vrcp.pop %v928
            %v956 = vmul.f32 1.0, %v955
            %v957 = vrcp.pop %v929
            %v958 = vmul.f32 1.0, %v957
            %v959 = vrcp.pop %v930
            %v960 = vmul.f32 1.0, %v959
            %v961 = vrcp.pop %v931
            %v962 = vmul.f32 1.0, %v961
            %v963 = vrcp.pop %v932
            %v964 = vmul.f32 1.0, %v963
            %vm965 = vcmask 7168
            %966 = vst.msk [vmem:[#allocation2] sm:$0xff] %vm965, %v934
            %967 = vst.msk [vmem:[#allocation2 + $0x8] sm:$0xff] %vm965, %v936
            %968 = vst.msk [vmem:[#allocation2 + $0x10] sm:$0xff] %vm965, %v938
            %969 = vst.msk [vmem:[#allocation2 + $0x18] sm:$0xff] %vm965, %v940
            %970 = vst.msk [vmem:[#allocation2 + $0x20] sm:$0xff] %vm965, %v942
            %971 = vst.msk [vmem:[#allocation2 + $0x28] sm:$0xff] %vm965, %v944
            %972 = vst.msk [vmem:[#allocation2 + $0x30] sm:$0xff] %vm965, %v946
            %973 = vst.msk [vmem:[#allocation2 + $0x38] sm:$0xff] %vm965, %v948
            %974 = vst.msk [vmem:[#allocation2 + $0x40] sm:$0xff] %vm965, %v950
            %975 = vst.msk [vmem:[#allocation2 + $0x48] sm:$0xff] %vm965, %v952
            %976 = vst.msk [vmem:[#allocation2 + $0x50] sm:$0xff] %vm965, %v954
            %977 = vst.msk [vmem:[#allocation2 + $0x58] sm:$0xff] %vm965, %v956
            %978 = vst.msk [vmem:[#allocation2 + $0x60] sm:$0xff] %vm965, %v958
            %979 = vst.msk [vmem:[#allocation2 + $0x68] sm:$0xff] %vm965, %v960
            %980 = vst.msk [vmem:[#allocation2 + $0x70] sm:$0xff] %vm965, %v962
            %981 = vst.msk [vmem:[#allocation2 + $0x78] sm:$0xff] %vm965, %v964
            %v982 = vld [vmem:[#allocation3] sm:$0xff]
            %v983 = vld [vmem:[#allocation3 + $0x8] sm:$0xff]
            %v984 = vld [vmem:[#allocation3 + $0x10] sm:$0xff]
            %v985 = vld [vmem:[#allocation3 + $0x18] sm:$0xff]
            %v986 = vld [vmem:[#allocation3 + $0x20] sm:$0xff]
            %v987 = vld [vmem:[#allocation3 + $0x28] sm:$0xff]
            %v988 = vld [vmem:[#allocation3 + $0x30] sm:$0xff]
            %v989 = vld [vmem:[#allocation3 + $0x38] sm:$0xff]
            %v990 = vld [vmem:[#allocation3 + $0x40] sm:$0xff]
            %v991 = vld [vmem:[#allocation3 + $0x48] sm:$0xff]
            %v992 = vld [vmem:[#allocation3 + $0x50] sm:$0xff]
            %v993 = vld [vmem:[#allocation3 + $0x58] sm:$0xff]
            %v994 = vld [vmem:[#allocation3 + $0x60] sm:$0xff]
            %v995 = vld [vmem:[#allocation3 + $0x68] sm:$0xff]
            %v996 = vld [vmem:[#allocation3 + $0x70] sm:$0xff]
            %v997 = vld [vmem:[#allocation3 + $0x78] sm:$0xff]
            %v998 = vrcp.pop %v982
            %v999 = vmul.f32 1.0, %v998
            %v1000 = vrcp.pop %v983
            %v1001 = vmul.f32 1.0, %v1000
            %v1002 = vrcp.pop %v984
            %v1003 = vmul.f32 1.0, %v1002
            %v1004 = vrcp.pop %v985
            %v1005 = vmul.f32 1.0, %v1004
            %v1006 = vrcp.pop %v986
            %v1007 = vmul.f32 1.0, %v1006
            %v1008 = vrcp.pop %v987
            %v1009 = vmul.f32 1.0, %v1008
            %v1010 = vrcp.pop %v988
            %v1011 = vmul.f32 1.0, %v1010
            %v1012 = vrcp.pop %v989
            %v1013 = vmul.f32 1.0, %v1012
            %v1014 = vrcp.pop %v990
            %v1015 = vmul.f32 1.0, %v1014
            %v1016 = vrcp.pop %v991
            %v1017 = vmul.f32 1.0, %v1016
            %v1018 = vrcp.pop %v992
            %v1019 = vmul.f32 1.0, %v1018
            %v1020 = vrcp.pop %v993
            %v1021 = vmul.f32 1.0, %v1020
            %v1022 = vrcp.pop %v994
            %v1023 = vmul.f32 1.0, %v1022
            %v1024 = vrcp.pop %v995
            %v1025 = vmul.f32 1.0, %v1024
            %v1026 = vrcp.pop %v996
            %v1027 = vmul.f32 1.0, %v1026
            %v1028 = vrcp.pop %v997
            %v1029 = vmul.f32 1.0, %v1028
            %1030 = vst.msk [vmem:[#allocation3] sm:$0xff] %vm965, %v999
            %1031 = vst.msk [vmem:[#allocation3 + $0x8] sm:$0xff] %vm965, %v1001
            %1032 = vst.msk [vmem:[#allocation3 + $0x10] sm:$0xff] %vm965, %v1003
            %1033 = vst.msk [vmem:[#allocation3 + $0x18] sm:$0xff] %vm965, %v1005
            %1034 = vst.msk [vmem:[#allocation3 + $0x20] sm:$0xff] %vm965, %v1007
            %1035 = vst.msk [vmem:[#allocation3 + $0x28] sm:$0xff] %vm965, %v1009
            %1036 = vst.msk [vmem:[#allocation3 + $0x30] sm:$0xff] %vm965, %v1011
            %1037 = vst.msk [vmem:[#allocation3 + $0x38] sm:$0xff] %vm965, %v1013
            %1038 = vst.msk [vmem:[#allocation3 + $0x40] sm:$0xff] %vm965, %v1015
            %1039 = vst.msk [vmem:[#allocation3 + $0x48] sm:$0xff] %vm965, %v1017
            %1040 = vst.msk [vmem:[#allocation3 + $0x50] sm:$0xff] %vm965, %v1019
            %1041 = vst.msk [vmem:[#allocation3 + $0x58] sm:$0xff] %vm965, %v1021
            %1042 = vst.msk [vmem:[#allocation3 + $0x60] sm:$0xff] %vm965, %v1023
            %1043 = vst.msk [vmem:[#allocation3 + $0x68] sm:$0xff] %vm965, %v1025
            %1044 = vst.msk [vmem:[#allocation3 + $0x70] sm:$0xff] %vm965, %v1027
            %1045 = vst.msk [vmem:[#allocation3 + $0x78] sm:$0xff] %vm965, %v1029
            %1046 = vst.msk [vmem:[#allocation4] sm:$0xff] %vm965, 0.0
            %1047 = vst.msk [vmem:[#allocation4 + $0x8] sm:$0xff] %vm965, 0.0
            %1048 = vst.msk [vmem:[#allocation4 + $0x10] sm:$0xff] %vm965, 0.0
            %1049 = vst.msk [vmem:[#allocation4 + $0x18] sm:$0xff] %vm965, 0.0
            %1050 = vst.msk [vmem:[#allocation4 + $0x20] sm:$0xff] %vm965, 0.0
            %1051 = vst.msk [vmem:[#allocation4 + $0x28] sm:$0xff] %vm965, 0.0
            %1052 = vst.msk [vmem:[#allocation4 + $0x30] sm:$0xff] %vm965, 0.0
            %1053 = vst.msk [vmem:[#allocation4 + $0x38] sm:$0xff] %vm965, 0.0
            %1054 = vst.msk [vmem:[#allocation4 + $0x40] sm:$0xff] %vm965, 0.0
            %1055 = vst.msk [vmem:[#allocation4 + $0x48] sm:$0xff] %vm965, 0.0
            %1056 = vst.msk [vmem:[#allocation4 + $0x50] sm:$0xff] %vm965, 0.0
            %1057 = vst.msk [vmem:[#allocation4 + $0x58] sm:$0xff] %vm965, 0.0
            %1058 = vst.msk [vmem:[#allocation4 + $0x60] sm:$0xff] %vm965, 0.0
            %1059 = vst.msk [vmem:[#allocation4 + $0x68] sm:$0xff] %vm965, 0.0
            %1060 = vst.msk [vmem:[#allocation4 + $0x70] sm:$0xff] %vm965, 0.0
            %1061 = vst.msk [vmem:[#allocation4 + $0x78] sm:$0xff] %vm965, 0.0
          $region68: #{tpu_custom_call.1} parent=63 // pred_fallthru
            _
          %v1062 = vld [vmem:[#allocation2] sm:$0xff]
          %v1063 = vld [vmem:[#allocation2 + $0x8] sm:$0xff]
          %v1064 = vld [vmem:[#allocation2 + $0x10] sm:$0xff]
          %v1065 = vld [vmem:[#allocation2 + $0x18] sm:$0xff]
          %v1066 = vld [vmem:[#allocation2 + $0x20] sm:$0xff]
          %v1067 = vld [vmem:[#allocation2 + $0x28] sm:$0xff]
          %v1068 = vld [vmem:[#allocation2 + $0x30] sm:$0xff]
          %v1069 = vld [vmem:[#allocation2 + $0x38] sm:$0xff]
          %v1070 = vld [vmem:[#allocation2 + $0x40] sm:$0xff]
          %v1071 = vld [vmem:[#allocation2 + $0x48] sm:$0xff]
          %v1072 = vld [vmem:[#allocation2 + $0x50] sm:$0xff]
          %v1073 = vld [vmem:[#allocation2 + $0x58] sm:$0xff]
          %v1074 = vld [vmem:[#allocation2 + $0x60] sm:$0xff]
          %v1075 = vld [vmem:[#allocation2 + $0x68] sm:$0xff]
          %v1076 = vld [vmem:[#allocation2 + $0x70] sm:$0xff]
          %v1077 = vld [vmem:[#allocation2 + $0x78] sm:$0xff]
          %1079 = vset.pattern.permute.xlu0 0
          %1080 = vperm.xlu0 %1079, %v1062
          %v1081 = vpop.permute.xlu0 %1080
          %1084 = vset.pattern.permute.xlu0 0
          %1085 = vperm.xlu0 %1084, %v1063
          %v1086 = vpop.permute.xlu0 %1085
          %1089 = vset.pattern.permute.xlu0 0
          %1090 = vperm.xlu0 %1089, %v1064
          %v1091 = vpop.permute.xlu0 %1090
          %1094 = vset.pattern.permute.xlu0 0
          %1095 = vperm.xlu0 %1094, %v1065
          %v1096 = vpop.permute.xlu0 %1095
          %1099 = vset.pattern.permute.xlu0 0
          %1100 = vperm.xlu0 %1099, %v1066
          %v1101 = vpop.permute.xlu0 %1100
          %1104 = vset.pattern.permute.xlu0 0
          %1105 = vperm.xlu0 %1104, %v1067
          %v1106 = vpop.permute.xlu0 %1105
          %1109 = vset.pattern.permute.xlu0 0
          %1110 = vperm.xlu0 %1109, %v1068
          %v1111 = vpop.permute.xlu0 %1110
          %1114 = vset.pattern.permute.xlu0 0
          %1115 = vperm.xlu0 %1114, %v1069
          %v1116 = vpop.permute.xlu0 %1115
          %1119 = vset.pattern.permute.xlu0 0
          %1120 = vperm.xlu0 %1119, %v1070
          %v1121 = vpop.permute.xlu0 %1120
          %1124 = vset.pattern.permute.xlu0 0
          %1125 = vperm.xlu0 %1124, %v1071
          %v1126 = vpop.permute.xlu0 %1125
          %1129 = vset.pattern.permute.xlu0 0
          %1130 = vperm.xlu0 %1129, %v1072
          %v1131 = vpop.permute.xlu0 %1130
          %1134 = vset.pattern.permute.xlu0 0
          %1135 = vperm.xlu0 %1134, %v1073
          %v1136 = vpop.permute.xlu0 %1135
          %1139 = vset.pattern.permute.xlu0 0
          %1140 = vperm.xlu0 %1139, %v1074
          %v1141 = vpop.permute.xlu0 %1140
          %1144 = vset.pattern.permute.xlu0 0
          %1145 = vperm.xlu0 %1144, %v1075
          %v1146 = vpop.permute.xlu0 %1145
          %1149 = vset.pattern.permute.xlu0 0
          %1150 = vperm.xlu0 %1149, %v1076
          %v1151 = vpop.permute.xlu0 %1150
          %1154 = vset.pattern.permute.xlu0 0
          %1155 = vperm.xlu0 %1154, %v1077
          %v1156 = vpop.permute.xlu0 %1155
          %v1158 = vmul.f32 %v675, %v1081
          %v1159 = vmul.f32 %v676, %v1086
          %v1160 = vmul.f32 %v677, %v1091
          %v1161 = vmul.f32 %v678, %v1096
          %v1162 = vmul.f32 %v679, %v1101
          %v1163 = vmul.f32 %v680, %v1106
          %v1164 = vmul.f32 %v681, %v1111
          %v1165 = vmul.f32 %v682, %v1116
          %v1166 = vmul.f32 %v683, %v1121
          %v1167 = vmul.f32 %v684, %v1126
          %v1168 = vmul.f32 %v685, %v1131
          %v1169 = vmul.f32 %v686, %v1136
          %v1170 = vmul.f32 %v687, %v1141
          %v1171 = vmul.f32 %v688, %v1146
          %v1172 = vmul.f32 %v689, %v1151
          %v1173 = vmul.f32 %v690, %v1156
          %v1174 = vld [vmem:[#allocation3] sm:$0xff]
          %v1175 = vld [vmem:[#allocation3 + $0x8] sm:$0xff]
          %v1176 = vld [vmem:[#allocation3 + $0x10] sm:$0xff]
          %v1177 = vld [vmem:[#allocation3 + $0x18] sm:$0xff]
          %v1178 = vld [vmem:[#allocation3 + $0x20] sm:$0xff]
          %v1179 = vld [vmem:[#allocation3 + $0x28] sm:$0xff]
          %v1180 = vld [vmem:[#allocation3 + $0x30] sm:$0xff]
          %v1181 = vld [vmem:[#allocation3 + $0x38] sm:$0xff]
          %v1182 = vld [vmem:[#allocation3 + $0x40] sm:$0xff]
          %v1183 = vld [vmem:[#allocation3 + $0x48] sm:$0xff]
          %v1184 = vld [vmem:[#allocation3 + $0x50] sm:$0xff]
          %v1185 = vld [vmem:[#allocation3 + $0x58] sm:$0xff]
          %v1186 = vld [vmem:[#allocation3 + $0x60] sm:$0xff]
          %v1187 = vld [vmem:[#allocation3 + $0x68] sm:$0xff]
          %v1188 = vld [vmem:[#allocation3 + $0x70] sm:$0xff]
          %v1189 = vld [vmem:[#allocation3 + $0x78] sm:$0xff]
          %1191 = vset.pattern.permute.xlu0 0
          %1192 = vperm.xlu0 %1191, %v1174
          %v1193 = vpop.permute.xlu0 %1192
          %1196 = vset.pattern.permute.xlu0 0
          %1197 = vperm.xlu0 %1196, %v1175
          %v1198 = vpop.permute.xlu0 %1197
          %1201 = vset.pattern.permute.xlu0 0
          %1202 = vperm.xlu0 %1201, %v1176
          %v1203 = vpop.permute.xlu0 %1202
          %1206 = vset.pattern.permute.xlu0 0
          %1207 = vperm.xlu0 %1206, %v1177
          %v1208 = vpop.permute.xlu0 %1207
          %1211 = vset.pattern.permute.xlu0 0
          %1212 = vperm.xlu0 %1211, %v1178
          %v1213 = vpop.permute.xlu0 %1212
          %1216 = vset.pattern.permute.xlu0 0
          %1217 = vperm.xlu0 %1216, %v1179
          %v1218 = vpop.permute.xlu0 %1217
          %1221 = vset.pattern.permute.xlu0 0
          %1222 = vperm.xlu0 %1221, %v1180
          %v1223 = vpop.permute.xlu0 %1222
          %1226 = vset.pattern.permute.xlu0 0
          %1227 = vperm.xlu0 %1226, %v1181
          %v1228 = vpop.permute.xlu0 %1227
          %1231 = vset.pattern.permute.xlu0 0
          %1232 = vperm.xlu0 %1231, %v1182
          %v1233 = vpop.permute.xlu0 %1232
          %1236 = vset.pattern.permute.xlu0 0
          %1237 = vperm.xlu0 %1236, %v1183
          %v1238 = vpop.permute.xlu0 %1237
          %1241 = vset.pattern.permute.xlu0 0
          %1242 = vperm.xlu0 %1241, %v1184
          %v1243 = vpop.permute.xlu0 %1242
          %1246 = vset.pattern.permute.xlu0 0
          %1247 = vperm.xlu0 %1246, %v1185
          %v1248 = vpop.permute.xlu0 %1247
          %1251 = vset.pattern.permute.xlu0 0
          %1252 = vperm.xlu0 %1251, %v1186
          %v1253 = vpop.permute.xlu0 %1252
          %1256 = vset.pattern.permute.xlu0 0
          %1257 = vperm.xlu0 %1256, %v1187
          %v1258 = vpop.permute.xlu0 %1257
          %1261 = vset.pattern.permute.xlu0 0
          %1262 = vperm.xlu0 %1261, %v1188
          %v1263 = vpop.permute.xlu0 %1262
          %1266 = vset.pattern.permute.xlu0 0
          %1267 = vperm.xlu0 %1266, %v1189
          %v1268 = vpop.permute.xlu0 %1267
          %v1270 = vmul.f32 %v691, %v1193
          %v1271 = vmul.f32 %v692, %v1198
          %v1272 = vmul.f32 %v693, %v1203
          %v1273 = vmul.f32 %v694, %v1208
          %v1274 = vmul.f32 %v695, %v1213
          %v1275 = vmul.f32 %v696, %v1218
          %v1276 = vmul.f32 %v697, %v1223
          %v1277 = vmul.f32 %v698, %v1228
          %v1278 = vmul.f32 %v699, %v1233
          %v1279 = vmul.f32 %v700, %v1238
          %v1280 = vmul.f32 %v701, %v1243
          %v1281 = vmul.f32 %v702, %v1248
          %v1282 = vmul.f32 %v703, %v1253
          %v1283 = vmul.f32 %v704, %v1258
          %v1284 = vmul.f32 %v705, %v1263
          %v1285 = vmul.f32 %v706, %v1268
          %v1286 = vadd.f32 %v1270, 1e-07
          %v1287 = vadd.f32 %v1271, 1e-07
          %v1288 = vadd.f32 %v1272, 1e-07
          %v1289 = vadd.f32 %v1273, 1e-07
          %v1290 = vadd.f32 %v1274, 1e-07
          %v1291 = vadd.f32 %v1275, 1e-07
          %v1292 = vadd.f32 %v1276, 1e-07
          %v1293 = vadd.f32 %v1277, 1e-07
          %v1294 = vadd.f32 %v1278, 1e-07
          %v1295 = vadd.f32 %v1279, 1e-07
          %v1296 = vadd.f32 %v1280, 1e-07
          %v1297 = vadd.f32 %v1281, 1e-07
          %v1298 = vadd.f32 %v1282, 1e-07
          %v1299 = vadd.f32 %v1283, 1e-07
          %v1300 = vadd.f32 %v1284, 1e-07
          %v1301 = vadd.f32 %v1285, 1e-07
          %v1302 = vadd.f32 %v1158, 1e-07
          %v1303 = vadd.f32 %v1159, 1e-07
          %v1304 = vadd.f32 %v1160, 1e-07
          %v1305 = vadd.f32 %v1161, 1e-07
          %v1306 = vadd.f32 %v1162, 1e-07
          %v1307 = vadd.f32 %v1163, 1e-07
          %v1308 = vadd.f32 %v1164, 1e-07
          %v1309 = vadd.f32 %v1165, 1e-07
          %v1310 = vadd.f32 %v1166, 1e-07
          %v1311 = vadd.f32 %v1167, 1e-07
          %v1312 = vadd.f32 %v1168, 1e-07
          %v1313 = vadd.f32 %v1169, 1e-07
          %v1314 = vadd.f32 %v1170, 1e-07
          %v1315 = vadd.f32 %v1171, 1e-07
          %v1316 = vadd.f32 %v1172, 1e-07
          %v1317 = vadd.f32 %v1173, 1e-07
          %v1318 = vrcp.pop %v1302
          %v1319 = vmul.f32 %v1286, %v1318
          %v1320 = vrcp.pop %v1303
          %v1321 = vmul.f32 %v1287, %v1320
          %v1322 = vrcp.pop %v1304
          %v1323 = vmul.f32 %v1288, %v1322
          %v1324 = vrcp.pop %v1305
          %v1325 = vmul.f32 %v1289, %v1324
          %v1326 = vrcp.pop %v1306
          %v1327 = vmul.f32 %v1290, %v1326
          %v1328 = vrcp.pop %v1307
          %v1329 = vmul.f32 %v1291, %v1328
          %v1330 = vrcp.pop %v1308
          %v1331 = vmul.f32 %v1292, %v1330
          %v1332 = vrcp.pop %v1309
          %v1333 = vmul.f32 %v1293, %v1332
          %v1334 = vrcp.pop %v1310
          %v1335 = vmul.f32 %v1294, %v1334
          %v1336 = vrcp.pop %v1311
          %v1337 = vmul.f32 %v1295, %v1336
          %v1338 = vrcp.pop %v1312
          %v1339 = vmul.f32 %v1296, %v1338
          %v1340 = vrcp.pop %v1313
          %v1341 = vmul.f32 %v1297, %v1340
          %v1342 = vrcp.pop %v1314
          %v1343 = vmul.f32 %v1298, %v1342
          %v1344 = vrcp.pop %v1315
          %v1345 = vmul.f32 %v1299, %v1344
          %v1346 = vrcp.pop %v1316
          %v1347 = vmul.f32 %v1300, %v1346
          %v1348 = vrcp.pop %v1317
          %v1349 = vmul.f32 %v1301, %v1348
          %v1350 = vld [vmem:[#allocation4] sm:$0xff]
          %v1351 = vld [vmem:[#allocation4 + $0x8] sm:$0xff]
          %v1352 = vld [vmem:[#allocation4 + $0x10] sm:$0xff]
          %v1353 = vld [vmem:[#allocation4 + $0x18] sm:$0xff]
          %v1354 = vld [vmem:[#allocation4 + $0x20] sm:$0xff]
          %v1355 = vld [vmem:[#allocation4 + $0x28] sm:$0xff]
          %v1356 = vld [vmem:[#allocation4 + $0x30] sm:$0xff]
          %v1357 = vld [vmem:[#allocation4 + $0x38] sm:$0xff]
          %v1358 = vld [vmem:[#allocation4 + $0x40] sm:$0xff]
          %v1359 = vld [vmem:[#allocation4 + $0x48] sm:$0xff]
          %v1360 = vld [vmem:[#allocation4 + $0x50] sm:$0xff]
          %v1361 = vld [vmem:[#allocation4 + $0x58] sm:$0xff]
          %v1362 = vld [vmem:[#allocation4 + $0x60] sm:$0xff]
          %v1363 = vld [vmem:[#allocation4 + $0x68] sm:$0xff]
          %v1364 = vld [vmem:[#allocation4 + $0x70] sm:$0xff]
          %v1365 = vld [vmem:[#allocation4 + $0x78] sm:$0xff]
          %v1366 = vlog2.pop %v1319
          %v1367 = vmul.f32 %v1366, 0.6931472
          %v1368 = vlog2.pop %v1321
          %v1369 = vmul.f32 %v1368, 0.6931472
          %v1370 = vlog2.pop %v1323
          %v1371 = vmul.f32 %v1370, 0.6931472
          %v1372 = vlog2.pop %v1325
          %v1373 = vmul.f32 %v1372, 0.6931472
          %v1374 = vlog2.pop %v1327
          %v1375 = vmul.f32 %v1374, 0.6931472
          %v1376 = vlog2.pop %v1329
          %v1377 = vmul.f32 %v1376, 0.6931472
          %v1378 = vlog2.pop %v1331
          %v1379 = vmul.f32 %v1378, 0.6931472
          %v1380 = vlog2.pop %v1333
          %v1381 = vmul.f32 %v1380, 0.6931472
          %v1382 = vlog2.pop %v1335
          %v1383 = vmul.f32 %v1382, 0.6931472
          %v1384 = vlog2.pop %v1337
          %v1385 = vmul.f32 %v1384, 0.6931472
          %v1386 = vlog2.pop %v1339
          %v1387 = vmul.f32 %v1386, 0.6931472
          %v1388 = vlog2.pop %v1341
          %v1389 = vmul.f32 %v1388, 0.6931472
          %v1390 = vlog2.pop %v1343
          %v1391 = vmul.f32 %v1390, 0.6931472
          %v1392 = vlog2.pop %v1345
          %v1393 = vmul.f32 %v1392, 0.6931472
          %v1394 = vlog2.pop %v1347
          %v1395 = vmul.f32 %v1394, 0.6931472
          %v1396 = vlog2.pop %v1349
          %v1397 = vmul.f32 %v1396, 0.6931472
          %v1398 = vmul.f32 %v1270, %v1367
          %v1399 = vmul.f32 %v1271, %v1369
          %v1400 = vmul.f32 %v1272, %v1371
          %v1401 = vmul.f32 %v1273, %v1373
          %v1402 = vmul.f32 %v1274, %v1375
          %v1403 = vmul.f32 %v1275, %v1377
          %v1404 = vmul.f32 %v1276, %v1379
          %v1405 = vmul.f32 %v1277, %v1381
          %v1406 = vmul.f32 %v1278, %v1383
          %v1407 = vmul.f32 %v1279, %v1385
          %v1408 = vmul.f32 %v1280, %v1387
          %v1409 = vmul.f32 %v1281, %v1389
          %v1410 = vmul.f32 %v1282, %v1391
          %v1411 = vmul.f32 %v1283, %v1393
          %v1412 = vmul.f32 %v1284, %v1395
          %v1413 = vmul.f32 %v1285, %v1397
          %1414 = vadd.xlane.f32.xlu0 %v1398
          %v1415 = vpop.xlane.xlu0 %1414
          %1416 = vadd.xlane.f32.xlu0 %v1399
          %v1417 = vpop.xlane.xlu0 %1416
          %1418 = vadd.xlane.f32.xlu0 %v1400
          %v1419 = vpop.xlane.xlu0 %1418
          %1420 = vadd.xlane.f32.xlu0 %v1401
          %v1421 = vpop.xlane.xlu0 %1420
          %1422 = vadd.xlane.f32.xlu0 %v1402
          %v1423 = vpop.xlane.xlu0 %1422
          %1424 = vadd.xlane.f32.xlu0 %v1403
          %v1425 = vpop.xlane.xlu0 %1424
          %1426 = vadd.xlane.f32.xlu0 %v1404
          %v1427 = vpop.xlane.xlu0 %1426
          %1428 = vadd.xlane.f32.xlu0 %v1405
          %v1429 = vpop.xlane.xlu0 %1428
          %1430 = vadd.xlane.f32.xlu0 %v1406
          %v1431 = vpop.xlane.xlu0 %1430
          %1432 = vadd.xlane.f32.xlu0 %v1407
          %v1433 = vpop.xlane.xlu0 %1432
          %1434 = vadd.xlane.f32.xlu0 %v1408
          %v1435 = vpop.xlane.xlu0 %1434
          %1436 = vadd.xlane.f32.xlu0 %v1409
          %v1437 = vpop.xlane.xlu0 %1436
          %1438 = vadd.xlane.f32.xlu0 %v1410
          %v1439 = vpop.xlane.xlu0 %1438
          %1440 = vadd.xlane.f32.xlu0 %v1411
          %v1441 = vpop.xlane.xlu0 %1440
          %1442 = vadd.xlane.f32.xlu0 %v1412
          %v1443 = vpop.xlane.xlu0 %1442
          %1444 = vadd.xlane.f32.xlu0 %v1413
          %v1445 = vpop.xlane.xlu0 %1444
          %v1446 = vadd.f32 %v1350, %v1415
          %v1447 = vadd.f32 %v1351, %v1417
          %v1448 = vadd.f32 %v1352, %v1419
          %v1449 = vadd.f32 %v1353, %v1421
          %v1450 = vadd.f32 %v1354, %v1423
          %v1451 = vadd.f32 %v1355, %v1425
          %v1452 = vadd.f32 %v1356, %v1427
          %v1453 = vadd.f32 %v1357, %v1429
          %v1454 = vadd.f32 %v1358, %v1431
          %v1455 = vadd.f32 %v1359, %v1433
          %v1456 = vadd.f32 %v1360, %v1435
          %v1457 = vadd.f32 %v1361, %v1437
          %v1458 = vadd.f32 %v1362, %v1439
          %v1459 = vadd.f32 %v1363, %v1441
          %v1460 = vadd.f32 %v1364, %v1443
          %v1461 = vadd.f32 %v1365, %v1445
          %vm1462 = vcmask 7168
          %1463 = vst.msk [vmem:[#allocation4] sm:$0xff] %vm1462, %v1446
          %1464 = vst.msk [vmem:[#allocation4 + $0x8] sm:$0xff] %vm1462, %v1447
          %1465 = vst.msk [vmem:[#allocation4 + $0x10] sm:$0xff] %vm1462, %v1448
          %1466 = vst.msk [vmem:[#allocation4 + $0x18] sm:$0xff] %vm1462, %v1449
          %1467 = vst.msk [vmem:[#allocation4 + $0x20] sm:$0xff] %vm1462, %v1450
          %1468 = vst.msk [vmem:[#allocation4 + $0x28] sm:$0xff] %vm1462, %v1451
          %1469 = vst.msk [vmem:[#allocation4 + $0x30] sm:$0xff] %vm1462, %v1452
          %1470 = vst.msk [vmem:[#allocation4 + $0x38] sm:$0xff] %vm1462, %v1453
          %1471 = vst.msk [vmem:[#allocation4 + $0x40] sm:$0xff] %vm1462, %v1454
          %1472 = vst.msk [vmem:[#allocation4 + $0x48] sm:$0xff] %vm1462, %v1455
          %1473 = vst.msk [vmem:[#allocation4 + $0x50] sm:$0xff] %vm1462, %v1456
          %1474 = vst.msk [vmem:[#allocation4 + $0x58] sm:$0xff] %vm1462, %v1457
          %1475 = vst.msk [vmem:[#allocation4 + $0x60] sm:$0xff] %vm1462, %v1458
          %1476 = vst.msk [vmem:[#allocation4 + $0x68] sm:$0xff] %vm1462, %v1459
          %1477 = vst.msk [vmem:[#allocation4 + $0x70] sm:$0xff] %vm1462, %v1460
          %1478 = vst.msk [vmem:[#allocation4 + $0x78] sm:$0xff] %vm1462, %v1461
          // Predicated region
          $region69: #{tpu_custom_call.1} parent=63 // pred_check
            %p1479 = pneg %p913
          $region70: #{tpu_custom_call.1} parent=63 // pred_check_branch
            %1481 = sbr.rel (%p1479) target = $region72
          $region71: #{tpu_custom_call.1} parent=63 // pred_region
            %v1482 = vld [vmem:[#allocation4] sm:$0xff]
            %v1483 = vld [vmem:[#allocation4 + $0x8] sm:$0xff]
            %v1484 = vld [vmem:[#allocation4 + $0x10] sm:$0xff]
            %v1485 = vld [vmem:[#allocation4 + $0x18] sm:$0xff]
            %v1486 = vld [vmem:[#allocation4 + $0x20] sm:$0xff]
            %v1487 = vld [vmem:[#allocation4 + $0x28] sm:$0xff]
            %v1488 = vld [vmem:[#allocation4 + $0x30] sm:$0xff]
            %v1489 = vld [vmem:[#allocation4 + $0x38] sm:$0xff]
            %v1490 = vld [vmem:[#allocation4 + $0x40] sm:$0xff]
            %v1491 = vld [vmem:[#allocation4 + $0x48] sm:$0xff]
            %v1492 = vld [vmem:[#allocation4 + $0x50] sm:$0xff]
            %v1493 = vld [vmem:[#allocation4 + $0x58] sm:$0xff]
            %v1494 = vld [vmem:[#allocation4 + $0x60] sm:$0xff]
            %v1495 = vld [vmem:[#allocation4 + $0x68] sm:$0xff]
            %v1496 = vld [vmem:[#allocation4 + $0x70] sm:$0xff]
            %v1497 = vld [vmem:[#allocation4 + $0x78] sm:$0xff]
            %s1498 = smul.u32 %s24, 128
            %v1499 = vlaneseq
            %v1500 = vshrl.u32 %v1499, 7
            %v1501 = vadd.s32 %v1500, 8
            %v1502 = vadd.s32 %v1500, 16
            %v1503 = vadd.s32 %v1500, 24
            %v1504 = vadd.s32 %v1500, 32
            %v1505 = vadd.s32 %v1500, 40
            %v1506 = vadd.s32 %v1500, 48
            %v1507 = vadd.s32 %v1500, 56
            %v1508 = vadd.s32 %v1500, 64
            %v1509 = vadd.s32 %v1500, 72
            %v1510 = vadd.s32 %v1500, 80
            %v1511 = vadd.s32 %v1500, 88
            %v1512 = vadd.s32 %v1500, 96
            %v1513 = vadd.s32 %v1500, 104
            %v1514 = vadd.s32 %v1500, 112
            %v1515 = vadd.s32 %v1500, 120
            %v1516 = vstv %s1498
            %v1517 = vadd.s32 %v1516, %v1500
            %v1518 = vadd.s32 %v1516, %v1501
            %v1519 = vadd.s32 %v1516, %v1502
            %v1520 = vadd.s32 %v1516, %v1503
            %v1521 = vadd.s32 %v1516, %v1504
            %v1522 = vadd.s32 %v1516, %v1505
            %v1523 = vadd.s32 %v1516, %v1506
            %v1524 = vadd.s32 %v1516, %v1507
            %v1525 = vadd.s32 %v1516, %v1508
            %v1526 = vadd.s32 %v1516, %v1509
            %v1527 = vadd.s32 %v1516, %v1510
            %v1528 = vadd.s32 %v1516, %v1511
            %v1529 = vadd.s32 %v1516, %v1512
            %v1530 = vadd.s32 %v1516, %v1513
            %v1531 = vadd.s32 %v1516, %v1514
            %v1532 = vadd.s32 %v1516, %v1515
            %vm1533 = vcmp.lt.s32.totalorder %v1517, 8
            %vm1534 = vcmp.lt.s32.totalorder %v1518, 8
            %vm1535 = vcmp.lt.s32.totalorder %v1519, 8
            %vm1536 = vcmp.lt.s32.totalorder %v1520, 8
            %vm1537 = vcmp.lt.s32.totalorder %v1521, 8
            %vm1538 = vcmp.lt.s32.totalorder %v1522, 8
            %vm1539 = vcmp.lt.s32.totalorder %v1523, 8
            %vm1540 = vcmp.lt.s32.totalorder %v1524, 8
            %vm1541 = vcmp.lt.s32.totalorder %v1525, 8
            %vm1542 = vcmp.lt.s32.totalorder %v1526, 8
            %vm1543 = vcmp.lt.s32.totalorder %v1527, 8
            %vm1544 = vcmp.lt.s32.totalorder %v1528, 8
            %vm1545 = vcmp.lt.s32.totalorder %v1529, 8
            %vm1546 = vcmp.lt.s32.totalorder %v1530, 8
            %vm1547 = vcmp.lt.s32.totalorder %v1531, 8
            %vm1548 = vcmp.lt.s32.totalorder %v1532, 8
            %v1549 = vsel %vm1533, %v1482, 0.0
            %v1550 = vsel %vm1534, %v1483, 0.0
            %v1551 = vsel %vm1535, %v1484, 0.0
            %v1552 = vsel %vm1536, %v1485, 0.0
            %v1553 = vsel %vm1537, %v1486, 0.0
            %v1554 = vsel %vm1538, %v1487, 0.0
            %v1555 = vsel %vm1539, %v1488, 0.0
            %v1556 = vsel %vm1540, %v1489, 0.0
            %v1557 = vsel %vm1541, %v1490, 0.0
            %v1558 = vsel %vm1542, %v1491, 0.0
            %v1559 = vsel %vm1543, %v1492, 0.0
            %v1560 = vsel %vm1544, %v1493, 0.0
            %v1561 = vsel %vm1545, %v1494, 0.0
            %v1562 = vsel %vm1546, %v1495, 0.0
            %v1563 = vsel %vm1547, %v1496, 0.0
            %v1564 = vsel %vm1548, %v1497, 0.0
            %v1565 = vsel %vm1462, %v1549, 0.0
            %v1566 = vsel %vm1462, %v1550, 0.0
            %v1567 = vadd.f32 %v1565, %v1566
            %v1568 = vsel %vm1462, %v1551, 0.0
            %v1569 = vadd.f32 %v1567, %v1568
            %v1570 = vsel %vm1462, %v1552, 0.0
            %v1571 = vadd.f32 %v1569, %v1570
            %v1572 = vsel %vm1462, %v1553, 0.0
            %v1573 = vadd.f32 %v1571, %v1572
            %v1574 = vsel %vm1462, %v1554, 0.0
            %v1575 = vadd.f32 %v1573, %v1574
            %v1576 = vsel %vm1462, %v1555, 0.0
            %v1577 = vadd.f32 %v1575, %v1576
            %v1578 = vsel %vm1462, %v1556, 0.0
            %v1579 = vadd.f32 %v1577, %v1578
            %v1580 = vsel %vm1462, %v1557, 0.0
            %v1581 = vadd.f32 %v1579, %v1580
            %v1582 = vsel %vm1462, %v1558, 0.0
            %v1583 = vadd.f32 %v1581, %v1582
            %v1584 = vsel %vm1462, %v1559, 0.0
            %v1585 = vadd.f32 %v1583, %v1584
            %v1586 = vsel %vm1462, %v1560, 0.0
            %v1587 = vadd.f32 %v1585, %v1586
            %v1588 = vsel %vm1462, %v1561, 0.0
            %v1589 = vadd.f32 %v1587, %v1588
            %v1590 = vsel %vm1462, %v1562, 0.0
            %v1591 = vadd.f32 %v1589, %v1590
            %v1592 = vsel %vm1462, %v1563, 0.0
            %v1593 = vadd.f32 %v1591, %v1592
            %v1594 = vsel %vm1462, %v1564, 0.0
            %v1595 = vadd.f32 %v1593, %v1594
            %1596 = vadd.xlane.f32.xlu0 %v1595
            %v1597 = vpop.xlane.xlu0 %1596
            %v1598 = vrot.slane %v1597, 4
            %v1599 = vadd.f32 %v1597, %v1598
            %v1600 = vrot.slane %v1599, 2
            %v1601 = vadd.f32 %v1599, %v1600
            %v1602 = vrot.slane %v1601, 1
            %v1603 = vadd.f32 %v1601, %v1602
            %s1604 = vtos %v1603
            %v1605 = vstv %s1604
            %1606 = vst [vmem:[#allocation13] sm:$0x1] %v1605
          $region72: #{tpu_custom_call.1} parent=63 // pred_fallthru
            _
        $region64: #{tpu_custom_call.1} parent=35 // pred_fallthru
          _
        // Predicated region
        $region73: #{tpu_custom_call.1} parent=35 // pred_check
          %p1607 = pneg %p160
        $region74: #{tpu_custom_call.1} parent=35 // pred_check_branch
          %1609 = sbr.rel (%p1607) target = $region76
        $region75: #{tpu_custom_call.1} parent=35 // pred_region
          %s1611 = ssub.s32 16, 16
          %1612 = vsyncadd [#allocation7], %s1611
          %s1613 = smul.addr %s24, 16
          %s1614 = scalar_lea.hbm %s4, %s1613
          %s1616 = sshll.u32 [#allocation13], 4
          %s1617 = int_to_ptr.vmem [resolvable:$true] %s1616
          %1619 = dma.vmem_to_hbm [thread:$0]  %s1617, 16, %s1614, [#allocation7]
        $region76: #{tpu_custom_call.1} parent=35 // pred_fallthru
          _
        // Predicated region
        $region77: #{tpu_custom_call.1} parent=35 // pred_check
          %p1620 = pneg %p160
        $region78: #{tpu_custom_call.1} parent=35 // pred_check_branch
          %1622 = sbr.rel (%p1620) target = $region80
        $region79: #{tpu_custom_call.1} parent=35 // pred_region
          %1623 = dma.done [#allocation7], 16
        $region80: #{tpu_custom_call.1} parent=35 // pred_fallthru
          _
      $region36: #{tpu_custom_call.1} parent=5 // pred_fallthru
        _
      %p1624 = scmp.le.s32.totalorder 2, %s14
      // Predicated region
      $region81: #{tpu_custom_call.1} parent=5 // pred_check
        %p1625 = pneg %p1624
      $region82: #{tpu_custom_call.1} parent=5 // pred_check_branch
        %1627 = sbr.rel (%p1625) target = $region84
      $region83: #{tpu_custom_call.1} parent=5 // pred_region
        %s1628 = ssub.s32 %s14, 2
      $region84: #{tpu_custom_call.1} parent=5 // pred_fallthru
        _
    $region6: #{tpu_custom_call.1} parent=1 // loop_footer
      %s18 = sadd.s32 1, %s14
    $region7: #{tpu_custom_call.1} parent=1 // loop_footer_branch
      %13 = sbr.rel target = $region3
    $region8: #{tpu_custom_call.1} parent=1 // loop_exit
      _
    %1629 = vsyncpa [#allocation6], 1
    %s1630 = scalar_lea.sflag [#allocation6], 1
    %1631 = vsyncpa %s1630, 1
    %1632 = vsyncpa [#allocation9], 1
    %1633 = vsyncpa [#allocation12], 1
    %1634 = vsyncpa [#allocation7], 1
    %s1635 = scalar_lea.sflag [#allocation7], 1
    %1636 = vsyncpa %s1635, 1

</llo_original>
